<compile_context>
chip_gen: v6e
topology: v6e:2x2x1
jax: 0.10.0
libtpu: 0.0.40
codegen_flags: <defaults>
</compile_context>

<pallas_src>
import jax
import jax.numpy as jnp
from jax.experimental import pallas as pl
from jax.experimental.pallas import tpu as pltpu

LANE = 128     # lane width: pad output-feature dims to multiples of this
SUBLANE = 8    # sublane width: batch tiles are multiples of this


def _round_up(x, m):
    return (x + m - 1) // m * m


# ---------------------------------------------------------------------------
# Fused kernel: one batch tile per grid step, all layers inside.
# refs = (x, [w_i, shift_i]*num_hidden, w_last, bias_last, out)
# ---------------------------------------------------------------------------
def _make_fused_mlp_kernel(num_hidden):
    def kernel(*refs):
        x_ref = refs[0]
        o_ref = refs[-1]
        h = x_ref[...]                                   # f32 activations
        idx = 1
        for _ in range(num_hidden):
            w_ref, t_ref = refs[idx], refs[idx + 1]
            idx += 2
            # bf16 matmul on the MXU, f32 accumulation.
            z = jnp.dot(h.astype(jnp.bfloat16), w_ref[...],
                        preferred_element_type=jnp.float32)
            # folded (linear bias + BatchNorm) shift, then ReLU; dropout = id (eval)
            h = jnp.maximum(z + t_ref[...], 0.0)
        w_ref, b_ref = refs[idx], refs[idx + 1]
        z = jnp.dot(h.astype(jnp.bfloat16), w_ref[...],
                    preferred_element_type=jnp.float32) + b_ref[...]
        # numerically stable log_softmax in f32; padded logits carry a -1e30
        # bias so exp underflows to 0 in the reductions.
        m = jnp.max(z, axis=-1, keepdims=True)
        shifted = z - m
        lse = jnp.log(jnp.sum(jnp.exp(shifted), axis=-1, keepdims=True))
        o_ref[...] = (shifted - lse).astype(o_ref.dtype)

    return kernel


# ---------------------------------------------------------------------------
# One-time prepack: fold BN scale into weights, pad to lane-dense shapes,
# cast weights to bf16 (shifts/bias stay f32).
# ---------------------------------------------------------------------------
def prepack_params(params):
    packed = []
    cur_in = params[0][1].shape[0]                        # in_channels (unpadded)
    for p in params[:-1]:
        _, w, scale, shift = p
        cout = w.shape[1]
        cout_pad = _round_up(cout, LANE)
        w_folded = w * scale                              # fold BN scale into columns
        w_pad = jnp.pad(w_folded,
                        ((0, cur_in - w.shape[0]), (0, cout_pad - cout))
                        ).astype(jnp.bfloat16)
        t_pad = jnp.pad(shift, ((0, 0), (0, cout_pad - cout)))   # f32; pad cols -> 0 post-ReLU
        packed.append((w_pad, t_pad))
        cur_in = cout_pad
    _, w, b = params[-1]
    out_ch = w.shape[1]
    cout_pad = _round_up(out_ch, LANE)
    w_pad = jnp.pad(w, ((0, cur_in - w.shape[0]), (0, cout_pad - out_ch))
                    ).astype(jnp.bfloat16)
    # huge negative bias on padded logits (added to the f32 accumulator)
    b_pad = jnp.pad(b, ((0, 0), (0, cout_pad - out_ch)), constant_values=-1e30)
    packed.append((w_pad, b_pad))
    return packed, out_ch


# ---------------------------------------------------------------------------
# Build a forward function for a fixed batch size: specs + pallas_call built
# once, only x flows per call.
# ---------------------------------------------------------------------------
def make_mlp_forward(params, batch_size, *, single_buffer_weights=True):
    packed, out_ch = prepack_params(params)
    num_hidden = len(packed) - 1
    Cin = params[0][1].shape[0]
    N = batch_size

    # Batch tiling: big tiles (amortize ~0.35us per grid step on single-TC
    # v5e/v6e) but keep >= 2 grid steps when possible so v7x's two TensorCores
    # both get work via dimension_semantics=("parallel",).
    Nr = _round_up(max(N, SUBLANE), SUBLANE)
    if Nr >= 2 * SUBLANE:
        tm = min(512, _round_up(pl.cdiv(Nr, 2), SUBLANE))
    else:
        tm = Nr
    Npad = _round_up(Nr, tm)

    single_buffer_weights = single_buffer_weights and hasattr(pl, "Buffered")

    def weight_spec(shape):
        # grid-invariant blocks: single-buffer them (no overlap benefit from
        # double buffering, halves their VMEM footprint).
        if single_buffer_weights:
            return pl.BlockSpec(shape, lambda i: (0, 0),
                                pipeline_mode=pl.Buffered(1))
        return pl.BlockSpec(shape, lambda i: (0, 0))

    in_specs = [pl.BlockSpec((tm, Cin), lambda i: (i, 0))]   # x: batch-tiled
    inputs = []
    flops = 0
    weight_bytes = 0
    for w_pad, t_pad in packed[:-1]:
        inputs += [w_pad, t_pad]
        in_specs += [weight_spec(w_pad.shape), weight_spec(t_pad.shape)]
        flops += 2 * Npad * w_pad.shape[0] * w_pad.shape[1]
        weight_bytes += w_pad.size * 2 + t_pad.size * 4
    w_last, b_last = packed[-1]
    Cout_pad = w_last.shape[1]
    inputs += [w_last, b_last]
    in_specs += [weight_spec(w_last.shape), weight_spec(b_last.shape)]
    flops += 2 * Npad * w_last.shape[0] * w_last.shape[1]
    weight_bytes += w_last.size * 2 + b_last.size * 4

    cost = pl.CostEstimate(
        flops=flops,
        transcendentals=Npad * Cout_pad + Npad,            # exp + log in log_softmax
        bytes_accessed=Npad * Cin * 4 + weight_bytes + Npad * Cout_pad * 4,
    )

    # VMEM budget derived from resident bytes + generous headroom for Mosaic
    # internal scratch; capped at 48 MiB (leaves headroom on v7x's 64 MiB).
    wbuf = 1 if single_buffer_weights else 2
    resident = (2 * tm * Cin * 4            # x tile, double buffered
                + wbuf * weight_bytes       # weights / shifts / bias
                + 2 * tm * Cout_pad * 4)    # output tile, double buffered
    vmem_limit = min(max(2 * resident + (8 << 20), 16 << 20), 48 << 20)

    call = pl.pallas_call(
        _make_fused_mlp_kernel(num_hidden),
        out_shape=jax.ShapeDtypeStruct((Npad, Cout_pad), jnp.float32),
        grid=(Npad // tm,),
        in_specs=in_specs,
        out_specs=pl.BlockSpec((tm, Cout_pad), lambda i: (i, 0)),
        compiler_params=pltpu.CompilerParams(
            dimension_semantics=("parallel",),
            vmem_limit_bytes=vmem_limit,
        ),
        cost_estimate=cost,
    )

    weights = tuple(inputs)

    def forward(x):
        assert x.shape == (N, Cin)
        if Npad != N:
            x = jnp.pad(x, ((0, Npad - N), (0, 0)))
        out = call(x, *weights)
        return out[:N, :out_ch]

    return jax.jit(forward)


# ---------------------------------------------------------------------------
# Parameter construction (deterministic, mimics nn.Linear / BatchNorm1d eval)
# ---------------------------------------------------------------------------
def init_mlp_params(key, in_channels, hidden_channels, out_channels, num_layers):
    dims = [in_channels] + [hidden_channels] * (num_layers - 1) + [out_channels]
    params = []
    eps = 1e-5
    for li in range(num_layers):
        fan_in, fan_out = dims[li], dims[li + 1]
        key, kw, kb, kg, kbt, km, kv = jax.random.split(key, 7)
        bound = 1.0 / jnp.sqrt(fan_in)
        # stored as [C_in, C_out] (transpose of PyTorch's [out, in])
        w = jax.random.uniform(kw, (fan_in, fan_out), jnp.float32, -bound, bound)
        b = jax.random.uniform(kb, (1, fan_out), jnp.float32, -bound, bound)
        if li < num_layers - 1:
            gamma = 1.0 + 0.1 * jax.random.normal(kg, (1, fan_out), jnp.float32)
            beta = 0.1 * jax.random.normal(kbt, (1, fan_out), jnp.float32)
            mean = 0.1 * jax.random.normal(km, (1, fan_out), jnp.float32)
            var = jnp.abs(1.0 + 0.1 * jax.random.normal(kv, (1, fan_out), jnp.float32))
            s = gamma / jnp.sqrt(var + eps)
            t = beta - mean * s
            params.append(("hidden", w, s, b * s + t))    # fold linear bias into BN shift
        else:
            params.append(("final", w, b))
    return params


def mlp_reference_f32(x, params):
    """Pure-JAX f32 reference (eval-mode semantics)."""
    h = x
    for p in params[:-1]:
        _, w, scale, shift = p
        h = jnp.maximum(jnp.dot(h, w) * scale + shift, 0.0)
    _, w, b = params[-1]
    return jax.nn.log_softmax(jnp.dot(h, w) + b, axis=-1)


def mlp_reference_bf16(x, params):
    """Pure-JAX reference emulating the kernel's bf16-matmul / f32-epilogue path."""
    h = x
    for p in params[:-1]:
        _, w, scale, shift = p
        z = jnp.dot(h.astype(jnp.bfloat16), (w * scale).astype(jnp.bfloat16),
                    preferred_element_type=jnp.float32)
        h = jnp.maximum(z + shift, 0.0)
    _, w, b = params[-1]
    z = jnp.dot(h.astype(jnp.bfloat16), w.astype(jnp.bfloat16),
                preferred_element_type=jnp.float32) + b
    return jax.nn.log_softmax(z, axis=-1)


# ---------------------------------------------------------------------------
if __name__ == "__main__":
    # config consistent with MLP(in_channels, hidden, out, num_layers, dropout)
    N = 256
    IN_CH = 16
    HIDDEN = 32
    OUT_CH = 8
    NUM_LAYERS = 3
    # dropout p = 0.5 (identity in eval mode)

    key = jax.random.PRNGKey(0)
    kx, kp = jax.random.split(key)
    x = jax.random.normal(kx, (N, IN_CH), jnp.float32)
    params = init_mlp_params(kp, IN_CH, HIDDEN, OUT_CH, NUM_LAYERS)

    try:
        fwd = make_mlp_forward(params, N, single_buffer_weights=True)
        out = jax.block_until_ready(fwd(x))
    except Exception:
        # pl.Buffered(1) pipeline_mode unsupported on this jax version: fall
        # back to default double-buffered weight blocks.
        fwd = make_mlp_forward(params, N, single_buffer_weights=False)
        out = jax.block_until_ready(fwd(x))

    assert out.shape == (N, OUT_CH)
    row_sums = jnp.exp(out).sum(axis=-1)
    assert bool(jnp.all(jnp.abs(row_sums - 1.0) < 1e-3))

    ref_bf16 = mlp_reference_bf16(x, params)
    assert bool(jnp.allclose(out, ref_bf16, atol=2e-3, rtol=2e-3))

    ref_f32 = mlp_reference_f32(x, params)
    assert bool(jnp.allclose(out, ref_f32, atol=5e-2, rtol=5e-2))

    print("KERNEL_OK")
</pallas_src>

<mosaic_0001>
module attributes {stable_mosaic.version = 11 : i64} {
  func.func @kernel(%arg0: i32, %arg1: memref<128x16xf32, #tpu.memory_space<vmem>>, %arg2: memref<16x128xbf16, #tpu.memory_space<vmem>>, %arg3: memref<1x128xf32, #tpu.memory_space<vmem>>, %arg4: memref<128x128xbf16, #tpu.memory_space<vmem>>, %arg5: memref<1x128xf32, #tpu.memory_space<vmem>>, %arg6: memref<128x128xbf16, #tpu.memory_space<vmem>>, %arg7: memref<1x128xf32, #tpu.memory_space<vmem>>, %arg8: memref<128x128xf32, #tpu.memory_space<vmem>>) attributes {dimension_semantics = [#tpu.dimension_semantics<parallel>], iteration_bounds = array<i64: 2>, scalar_prefetch = 0 : i64, scratch_operands = 0 : i64, tpu.core_type = #tpu.core_type<tc>, window_params = [{transform_indices = @transform_0, window_bounds = array<i64: 128, 16>}, {pipeline_mode = #tpu.pipeline_mode<synchronous>, transform_indices = @transform_1, window_bounds = array<i64: 16, 128>}, {pipeline_mode = #tpu.pipeline_mode<synchronous>, transform_indices = @transform_2, window_bounds = array<i64: 1, 128>}, {pipeline_mode = #tpu.pipeline_mode<synchronous>, transform_indices = @transform_3, window_bounds = array<i64: 128, 128>}, {pipeline_mode = #tpu.pipeline_mode<synchronous>, transform_indices = @transform_4, window_bounds = array<i64: 1, 128>}, {pipeline_mode = #tpu.pipeline_mode<synchronous>, transform_indices = @transform_5, window_bounds = array<i64: 128, 128>}, {pipeline_mode = #tpu.pipeline_mode<synchronous>, transform_indices = @transform_6, window_bounds = array<i64: 1, 128>}, {transform_indices = @transform_7, window_bounds = array<i64: 128, 128>}]} {
    %c0 = arith.constant 0 : index
    %c0_0 = arith.constant 0 : index
    %0 = vector.load %arg1[%c0, %c0_0] : memref<128x16xf32, #tpu.memory_space<vmem>>, vector<128x16xf32>
    %1 = arith.truncf %0 : vector<128x16xf32> to vector<128x16xbf16>
    %c0_1 = arith.constant 0 : index
    %c0_2 = arith.constant 0 : index
    %2 = vector.load %arg2[%c0_1, %c0_2] : memref<16x128xbf16, #tpu.memory_space<vmem>>, vector<16x128xbf16>
    %cst = arith.constant dense<0.000000e+00> : vector<128x128xf32>
    %3 = tpu.matmul %1, %2, %cst {dimension_numbers = #tpu.dot_dimension_numbers<[1], [0], [0], [1], [0, 0, 1, 1], [], []>} : vector<128x16xbf16>, vector<16x128xbf16>, vector<128x128xf32> -> vector<128x128xf32>
    %c0_3 = arith.constant 0 : index
    %c0_4 = arith.constant 0 : index
    %4 = vector.load %arg3[%c0_3, %c0_4] : memref<1x128xf32, #tpu.memory_space<vmem>>, vector<1x128xf32>
    %5 = vector.broadcast %4 : vector<1x128xf32> to vector<128x128xf32>
    %6 = arith.addf %3, %5 : vector<128x128xf32>
    %cst_5 = arith.constant 0.000000e+00 : f32
    %7 = vector.broadcast %cst_5 : f32 to vector<128x128xf32>
    %8 = arith.maximumf %6, %7 : vector<128x128xf32>
    %9 = arith.truncf %8 : vector<128x128xf32> to vector<128x128xbf16>
    %c0_6 = arith.constant 0 : index
    %c0_7 = arith.constant 0 : index
    %10 = vector.load %arg4[%c0_6, %c0_7] : memref<128x128xbf16, #tpu.memory_space<vmem>>, vector<128x128xbf16>
    %cst_8 = arith.constant dense<0.000000e+00> : vector<128x128xf32>
    %11 = tpu.matmul %9, %10, %cst_8 {dimension_numbers = #tpu.dot_dimension_numbers<[1], [0], [0], [1], [0, 0, 1, 1], [], []>} : vector<128x128xbf16>, vector<128x128xbf16>, vector<128x128xf32> -> vector<128x128xf32>
    %c0_9 = arith.constant 0 : index
    %c0_10 = arith.constant 0 : index
    %12 = vector.load %arg5[%c0_9, %c0_10] : memref<1x128xf32, #tpu.memory_space<vmem>>, vector<1x128xf32>
    %13 = vector.broadcast %12 : vector<1x128xf32> to vector<128x128xf32>
    %14 = arith.addf %11, %13 : vector<128x128xf32>
    %cst_11 = arith.constant 0.000000e+00 : f32
    %15 = vector.broadcast %cst_11 : f32 to vector<128x128xf32>
    %16 = arith.maximumf %14, %15 : vector<128x128xf32>
    %17 = arith.truncf %16 : vector<128x128xf32> to vector<128x128xbf16>
    %c0_12 = arith.constant 0 : index
    %c0_13 = arith.constant 0 : index
    %18 = vector.load %arg6[%c0_12, %c0_13] : memref<128x128xbf16, #tpu.memory_space<vmem>>, vector<128x128xbf16>
    %cst_14 = arith.constant dense<0.000000e+00> : vector<128x128xf32>
    %19 = tpu.matmul %17, %18, %cst_14 {dimension_numbers = #tpu.dot_dimension_numbers<[1], [0], [0], [1], [0, 0, 1, 1], [], []>} : vector<128x128xbf16>, vector<128x128xbf16>, vector<128x128xf32> -> vector<128x128xf32>
    %c0_15 = arith.constant 0 : index
    %c0_16 = arith.constant 0 : index
    %20 = vector.load %arg7[%c0_15, %c0_16] : memref<1x128xf32, #tpu.memory_space<vmem>>, vector<1x128xf32>
    %21 = vector.broadcast %20 : vector<1x128xf32> to vector<128x128xf32>
    %22 = arith.addf %19, %21 : vector<128x128xf32>
    %cst_17 = arith.constant dense<0xFF800000> : vector<128xf32>
    %23 = vector.multi_reduction <maximumf>, %22, %cst_17 [1] : vector<128x128xf32> to vector<128xf32>
    %24 = vector.shape_cast %23 : vector<128xf32> to vector<128x1xf32>
    %25 = vector.broadcast %24 : vector<128x1xf32> to vector<128x128xf32>
    %26 = arith.subf %22, %25 : vector<128x128xf32>
    %27 = math.exp %26 : vector<128x128xf32>
    %cst_18 = arith.constant dense<0.000000e+00> : vector<128xf32>
    %28 = vector.multi_reduction <add>, %27, %cst_18 [1] : vector<128x128xf32> to vector<128xf32>
    %29 = vector.shape_cast %28 : vector<128xf32> to vector<128x1xf32>
    %30 = math.log %29 : vector<128x1xf32>
    %31 = vector.broadcast %30 : vector<128x1xf32> to vector<128x128xf32>
    %32 = arith.subf %26, %31 : vector<128x128xf32>
    %c0_19 = arith.constant 0 : index
    %c0_20 = arith.constant 0 : index
    %33 = vector.load %arg8[%c0_19, %c0_20] : memref<128x128xf32, #tpu.memory_space<vmem>>, vector<128x128xf32>
    tpu.vector_store %arg8[%c0_19, %c0_20], %32 {strides = array<i32>} : memref<128x128xf32, #tpu.memory_space<vmem>>, vector<128x128xf32>,
    return
  }
  func.func @transform_0(%arg0: i32) -> (i32, i32) {
    %c0_i32 = arith.constant 0 : i32
    %c0_i32_0 = arith.constant 0 : i32
    return %arg0, %c0_i32 : i32, i32
  }
  func.func @transform_1(%arg0: i32) -> (i32, i32) {
    %c0_i32 = arith.constant 0 : i32
    %c0_i32_0 = arith.constant 0 : i32
    %c0_i32_1 = arith.constant 0 : i32
    return %c0_i32, %c0_i32_0 : i32, i32
  }
  func.func @transform_2(%arg0: i32) -> (i32, i32) {
    %c0_i32 = arith.constant 0 : i32
    %c0_i32_0 = arith.constant 0 : i32
    %c0_i32_1 = arith.constant 0 : i32
    return %c0_i32, %c0_i32_0 : i32, i32
  }
  func.func @transform_3(%arg0: i32) -> (i32, i32) {
    %c0_i32 = arith.constant 0 : i32
    %c0_i32_0 = arith.constant 0 : i32
    %c0_i32_1 = arith.constant 0 : i32
    return %c0_i32, %c0_i32_0 : i32, i32
  }
  func.func @transform_4(%arg0: i32) -> (i32, i32) {
    %c0_i32 = arith.constant 0 : i32
    %c0_i32_0 = arith.constant 0 : i32
    %c0_i32_1 = arith.constant 0 : i32
    return %c0_i32, %c0_i32_0 : i32, i32
  }
  func.func @transform_5(%arg0: i32) -> (i32, i32) {
    %c0_i32 = arith.constant 0 : i32
    %c0_i32_0 = arith.constant 0 : i32
    %c0_i32_1 = arith.constant 0 : i32
    return %c0_i32, %c0_i32_0 : i32, i32
  }
  func.func @transform_6(%arg0: i32) -> (i32, i32) {
    %c0_i32 = arith.constant 0 : i32
    %c0_i32_0 = arith.constant 0 : i32
    %c0_i32_1 = arith.constant 0 : i32
    return %c0_i32, %c0_i32_0 : i32, i32
  }
  func.func @transform_7(%arg0: i32) -> (i32, i32) {
    %c0_i32 = arith.constant 0 : i32
    %c0_i32_0 = arith.constant 0 : i32
    return %arg0, %c0_i32 : i32, i32
  }
}

module attributes {stable_mosaic.version = 11 : i64} {
  func.func @kernel(%arg0: i32, %arg1: memref<128x16xf32, #tpu.memory_space<vmem>>, %arg2: memref<16x128xbf16, #tpu.memory_space<vmem>>, %arg3: memref<1x128xf32, #tpu.memory_space<vmem>>, %arg4: memref<128x128xbf16, #tpu.memory_space<vmem>>, %arg5: memref<1x128xf32, #tpu.memory_space<vmem>>, %arg6: memref<128x128xbf16, #tpu.memory_space<vmem>>, %arg7: memref<1x128xf32, #tpu.memory_space<vmem>>, %arg8: memref<128x128xf32, #tpu.memory_space<vmem>>) attributes {dimension_semantics = [#tpu.dimension_semantics<parallel>], iteration_bounds = array<i64: 2>, scalar_prefetch = 0 : i64, scratch_operands = 0 : i64, tpu.core_type = #tpu.core_type<tc>, window_params = [{transform_indices = @transform_0, window_bounds = array<i64: 128, 16>}, {pipeline_mode = #tpu.pipeline_mode<synchronous>, transform_indices = @transform_1, window_bounds = array<i64: 16, 128>}, {pipeline_mode = #tpu.pipeline_mode<synchronous>, transform_indices = @transform_2, window_bounds = array<i64: 1, 128>}, {pipeline_mode = #tpu.pipeline_mode<synchronous>, transform_indices = @transform_3, window_bounds = array<i64: 128, 128>}, {pipeline_mode = #tpu.pipeline_mode<synchronous>, transform_indices = @transform_4, window_bounds = array<i64: 1, 128>}, {pipeline_mode = #tpu.pipeline_mode<synchronous>, transform_indices = @transform_5, window_bounds = array<i64: 128, 128>}, {pipeline_mode = #tpu.pipeline_mode<synchronous>, transform_indices = @transform_6, window_bounds = array<i64: 1, 128>}, {transform_indices = @transform_7, window_bounds = array<i64: 128, 128>}]} {
    %c0 = arith.constant 0 : index
    %c0_0 = arith.constant 0 : index
    %0 = vector.load %arg1[%c0, %c0_0] : memref<128x16xf32, #tpu.memory_space<vmem>>, vector<128x16xf32>
    %1 = arith.truncf %0 : vector<128x16xf32> to vector<128x16xbf16>
    %c0_1 = arith.constant 0 : index
    %c0_2 = arith.constant 0 : index
    %2 = vector.load %arg2[%c0_1, %c0_2] : memref<16x128xbf16, #tpu.memory_space<vmem>>, vector<16x128xbf16>
    %cst = arith.constant dense<0.000000e+00> : vector<128x128xf32>
    %3 = tpu.matmul %1, %2, %cst {dimension_numbers = #tpu.dot_dimension_numbers<[1], [0], [0], [1], [0, 0, 1, 1], [], []>} : vector<128x16xbf16>, vector<16x128xbf16>, vector<128x128xf32> -> vector<128x128xf32>
    %c0_3 = arith.constant 0 : index
    %c0_4 = arith.constant 0 : index
    %4 = vector.load %arg3[%c0_3, %c0_4] : memref<1x128xf32, #tpu.memory_space<vmem>>, vector<1x128xf32>
    %5 = vector.broadcast %4 : vector<1x128xf32> to vector<128x128xf32>
    %6 = arith.addf %3, %5 : vector<128x128xf32>
    %cst_5 = arith.constant 0.000000e+00 : f32
    %7 = vector.broadcast %cst_5 : f32 to vector<128x128xf32>
    %8 = arith.maximumf %6, %7 : vector<128x128xf32>
    %9 = arith.truncf %8 : vector<128x128xf32> to vector<128x128xbf16>
    %c0_6 = arith.constant 0 : index
    %c0_7 = arith.constant 0 : index
    %10 = vector.load %arg4[%c0_6, %c0_7] : memref<128x128xbf16, #tpu.memory_space<vmem>>, vector<128x128xbf16>
    %cst_8 = arith.constant dense<0.000000e+00> : vector<128x128xf32>
    %11 = tpu.matmul %9, %10, %cst_8 {dimension_numbers = #tpu.dot_dimension_numbers<[1], [0], [0], [1], [0, 0, 1, 1], [], []>} : vector<128x128xbf16>, vector<128x128xbf16>, vector<128x128xf32> -> vector<128x128xf32>
    %c0_9 = arith.constant 0 : index
    %c0_10 = arith.constant 0 : index
    %12 = vector.load %arg5[%c0_9, %c0_10] : memref<1x128xf32, #tpu.memory_space<vmem>>, vector<1x128xf32>
    %13 = vector.broadcast %12 : vector<1x128xf32> to vector<128x128xf32>
    %14 = arith.addf %11, %13 : vector<128x128xf32>
    %cst_11 = arith.constant 0.000000e+00 : f32
    %15 = vector.broadcast %cst_11 : f32 to vector<128x128xf32>
    %16 = arith.maximumf %14, %15 : vector<128x128xf32>
    %17 = arith.truncf %16 : vector<128x128xf32> to vector<128x128xbf16>
    %c0_12 = arith.constant 0 : index
    %c0_13 = arith.constant 0 : index
    %18 = vector.load %arg6[%c0_12, %c0_13] : memref<128x128xbf16, #tpu.memory_space<vmem>>, vector<128x128xbf16>
    %cst_14 = arith.constant dense<0.000000e+00> : vector<128x128xf32>
    %19 = tpu.matmul %17, %18, %cst_14 {dimension_numbers = #tpu.dot_dimension_numbers<[1], [0], [0], [1], [0, 0, 1, 1], [], []>} : vector<128x128xbf16>, vector<128x128xbf16>, vector<128x128xf32> -> vector<128x128xf32>
    %c0_15 = arith.constant 0 : index
    %c0_16 = arith.constant 0 : index
    %20 = vector.load %arg7[%c0_15, %c0_16] : memref<1x128xf32, #tpu.memory_space<vmem>>, vector<1x128xf32>
    %21 = vector.broadcast %20 : vector<1x128xf32> to vector<128x128xf32>
    %22 = arith.addf %19, %21 : vector<128x128xf32>
    %cst_17 = arith.constant dense<0xFF800000> : vector<128xf32>
    %23 = vector.multi_reduction <maximumf>, %22, %cst_17 [1] : vector<128x128xf32> to vector<128xf32>
    %24 = vector.shape_cast %23 : vector<128xf32> to vector<128x1xf32>
    %25 = vector.broadcast %24 : vector<128x1xf32> to vector<128x128xf32>
    %26 = arith.subf %22, %25 : vector<128x128xf32>
    %27 = math.exp %26 : vector<128x128xf32>
    %cst_18 = arith.constant dense<0.000000e+00> : vector<128xf32>
    %28 = vector.multi_reduction <add>, %27, %cst_18 [1] : vector<128x128xf32> to vector<128xf32>
    %29 = vector.shape_cast %28 : vector<128xf32> to vector<128x1xf32>
    %30 = math.log %29 : vector<128x1xf32>
    %31 = vector.broadcast %30 : vector<128x1xf32> to vector<128x128xf32>
    %32 = arith.subf %26, %31 : vector<128x128xf32>
    %c0_19 = arith.constant 0 : index
    %c0_20 = arith.constant 0 : index
    %33 = vector.load %arg8[%c0_19, %c0_20] : memref<128x128xf32, #tpu.memory_space<vmem>>, vector<128x128xf32>
    tpu.vector_store %arg8[%c0_19, %c0_20], %32 {strides = array<i32>} : memref<128x128xf32, #tpu.memory_space<vmem>>, vector<128x128xf32>,
    return
  }
  func.func @transform_0(%arg0: i32) -> (i32, i32) {
    %c0_i32 = arith.constant 0 : i32
    %c0_i32_0 = arith.constant 0 : i32
    return %arg0, %c0_i32 : i32, i32
  }
  func.func @transform_1(%arg0: i32) -> (i32, i32) {
    %c0_i32 = arith.constant 0 : i32
    %c0_i32_0 = arith.constant 0 : i32
    %c0_i32_1 = arith.constant 0 : i32
    return %c0_i32, %c0_i32_0 : i32, i32
  }
  func.func @transform_2(%arg0: i32) -> (i32, i32) {
    %c0_i32 = arith.constant 0 : i32
    %c0_i32_0 = arith.constant 0 : i32
    %c0_i32_1 = arith.constant 0 : i32
    return %c0_i32, %c0_i32_0 : i32, i32
  }
  func.func @transform_3(%arg0: i32) -> (i32, i32) {
    %c0_i32 = arith.constant 0 : i32
    %c0_i32_0 = arith.constant 0 : i32
    %c0_i32_1 = arith.constant 0 : i32
    return %c0_i32, %c0_i32_0 : i32, i32
  }
  func.func @transform_4(%arg0: i32) -> (i32, i32) {
    %c0_i32 = arith.constant 0 : i32
    %c0_i32_0 = arith.constant 0 : i32
    %c0_i32_1 = arith.constant 0 : i32
    return %c0_i32, %c0_i32_0 : i32, i32
  }
  func.func @transform_5(%arg0: i32) -> (i32, i32) {
    %c0_i32 = arith.constant 0 : i32
    %c0_i32_0 = arith.constant 0 : i32
    %c0_i32_1 = arith.constant 0 : i32
    return %c0_i32, %c0_i32_0 : i32, i32
  }
  func.func @transform_6(%arg0: i32) -> (i32, i32) {
    %c0_i32 = arith.constant 0 : i32
    %c0_i32_0 = arith.constant 0 : i32
    %c0_i32_1 = arith.constant 0 : i32
    return %c0_i32, %c0_i32_0 : i32, i32
  }
  func.func @transform_7(%arg0: i32) -> (i32, i32) {
    %c0_i32 = arith.constant 0 : i32
    %c0_i32_0 = arith.constant 0 : i32
    return %arg0, %c0_i32 : i32, i32
  }
}

</mosaic_0001>

<llo_original>
// kernel: forward.1
$region0: #{forward.1}
  #allocation0 [shape = 'u32[]', space=smem, size = 0x4, offset = 0x4, fixed_abs, tag = 'smem constant byte address 0x4 - core index']
  #allocation1 [shape = 'u32[144,128]{1,0:T(1,128)}', space=vmem, size = 0x12000, scoped, tag = 'internal scratch']
  %s0 = inlined_call_operand.vmem [shape: f32[256,16], index: 0, kind: input, shape index: {}]
  %s1 = inlined_call_operand.vmem [shape: bf16[16,128], index: 1, kind: input, shape index: {}]
  %s2 = inlined_call_operand.vmem [shape: f32[1,128], index: 2, kind: input, shape index: {}]
  %s3 = inlined_call_operand.vmem [shape: bf16[128,128], index: 3, kind: input, shape index: {}]
  %s4 = inlined_call_operand.vmem [shape: f32[1,128], index: 4, kind: input, shape index: {}]
  %s5 = inlined_call_operand.vmem [shape: bf16[128,128], index: 5, kind: input, shape index: {}]
  %s6 = inlined_call_operand.vmem [shape: f32[1,128], index: 6, kind: input, shape index: {}]
  %s7 = inlined_call_operand.vmem [shape: f32[256,128], index: 7, kind: output, shape index: {}]
  %s8 = sld [smem:[#allocation0]]
  $region61: #{forward.1} parent=0
    _
  %s10 = ssub.s32 1, %s8
  %s11 = scalar_select 0, %s10, %s8
  loop: start=0, step=1, limit=4
  $region2: #{forward.1} parent=0 // loop_pre_header
    _
  $region3: #{forward.1} parent=0 // loop_header
    %s13 = sphi 0, %s17
    %p14 = scmp.ge.s32.totalorder %s13, 4
    %s23 = sphi 0, %s25
    %s26 = sphi 0, %s23
    %s27 = sphi 0, %s26
    %s43 = sphi 0, %s27
    %s47 = sphi 0, %s47
    %s49 = sphi 0, %s47
    %s50 = sphi 0, %s49
    %s64 = sphi 0, %s50
    %s68 = sphi 0, %s68
    %s70 = sphi 0, %s68
    %s71 = sphi 0, %s70
    %s85 = sphi 0, %s71
    %s89 = sphi 0, %s89
    %s91 = sphi 0, %s89
    %s92 = sphi 0, %s91
    %s106 = sphi 0, %s92
    %s110 = sphi 0, %s110
    %s112 = sphi 0, %s110
    %s113 = sphi 0, %s112
    %s127 = sphi 0, %s113
    %s131 = sphi 0, %s131
    %s133 = sphi 0, %s131
    %s134 = sphi 0, %s133
    %s148 = sphi 0, %s134
    %s152 = sphi 0, %s152
    %s154 = sphi 0, %s152
    %s155 = sphi 0, %s154
    %s169 = sphi 0, %s155
    %s175 = sphi 0, %s177
    %s178 = sphi 0, %s175
    %s179 = sphi 0, %s178
    %s195 = sphi 0, %s179
  $region4: #{forward.1} parent=0 // loop_header_branch
    %16 = sbr.rel (%p14) target = $region8
  $region5: #{forward.1} parent=0 // loop_body
    %s18 = ssub.s32 %s13, 1
    %s19 = ssub.s32 %s13, 2
    %s20 = sadd.s32 %s13, 1
    %s21 = ssub.s32 %s13, %s20
    %p22 = scmp.eq.s32.totalorder %s21, 0
    %s24 = sadd.s32 %s23, 1
    %s25 = scalar_select %p22, %s23, %s24
    %p28 = pneg %p22
    %p29 = scmp.eq.s32.totalorder %s13, 1
    %p30 = por %p28, %p29
    %p31 = scmp.ne.s32.totalorder %s23, %s26
    %p32 = scmp.eq.s32.totalorder %s13, 0
    %p33 = por %p31, %p32
    %p34 = scmp.ne.s32.totalorder %s23, %s26
    %p35 = scmp.eq.s32.totalorder %s18, 1
    %p36 = por %p34, %p35
    %p37 = scmp.ne.s32.totalorder %s26, %s27
    %p38 = scmp.eq.s32.totalorder %s18, 0
    %p39 = por %p37, %p38
    %p40 = scmp.ne.s32.totalorder %s26, %s27
    %p41 = scmp.eq.s32.totalorder %s19, 1
    %p42 = por %p40, %p41
    %p44 = scmp.ne.s32.totalorder %s27, %s43
    %p45 = scmp.eq.s32.totalorder %s19, 0
    %p46 = por %p44, %p45
    %s48 = sadd.s32 %s47, 1
    %p51 = scmp.eq.s32.totalorder %s13, 1
    %p52 = scmp.ne.s32.totalorder %s47, %s49
    %p53 = scmp.eq.s32.totalorder %s13, 0
    %p54 = por %p52, %p53
    %p55 = scmp.ne.s32.totalorder %s47, %s49
    %p56 = scmp.eq.s32.totalorder %s18, 1
    %p57 = por %p55, %p56
    %p58 = scmp.ne.s32.totalorder %s49, %s50
    %p59 = scmp.eq.s32.totalorder %s18, 0
    %p60 = por %p58, %p59
    %p61 = scmp.ne.s32.totalorder %s49, %s50
    %p62 = scmp.eq.s32.totalorder %s19, 1
    %p63 = por %p61, %p62
    %p65 = scmp.ne.s32.totalorder %s50, %s64
    %p66 = scmp.eq.s32.totalorder %s19, 0
    %p67 = por %p65, %p66
    %s69 = sadd.s32 %s68, 1
    %p72 = scmp.eq.s32.totalorder %s13, 1
    %p73 = scmp.ne.s32.totalorder %s68, %s70
    %p74 = scmp.eq.s32.totalorder %s13, 0
    %p75 = por %p73, %p74
    %p76 = scmp.ne.s32.totalorder %s68, %s70
    %p77 = scmp.eq.s32.totalorder %s18, 1
    %p78 = por %p76, %p77
    %p79 = scmp.ne.s32.totalorder %s70, %s71
    %p80 = scmp.eq.s32.totalorder %s18, 0
    %p81 = por %p79, %p80
    %p82 = scmp.ne.s32.totalorder %s70, %s71
    %p83 = scmp.eq.s32.totalorder %s19, 1
    %p84 = por %p82, %p83
    %p86 = scmp.ne.s32.totalorder %s71, %s85
    %p87 = scmp.eq.s32.totalorder %s19, 0
    %p88 = por %p86, %p87
    %s90 = sadd.s32 %s89, 1
    %p93 = scmp.eq.s32.totalorder %s13, 1
    %p94 = scmp.ne.s32.totalorder %s89, %s91
    %p95 = scmp.eq.s32.totalorder %s13, 0
    %p96 = por %p94, %p95
    %p97 = scmp.ne.s32.totalorder %s89, %s91
    %p98 = scmp.eq.s32.totalorder %s18, 1
    %p99 = por %p97, %p98
    %p100 = scmp.ne.s32.totalorder %s91, %s92
    %p101 = scmp.eq.s32.totalorder %s18, 0
    %p102 = por %p100, %p101
    %p103 = scmp.ne.s32.totalorder %s91, %s92
    %p104 = scmp.eq.s32.totalorder %s19, 1
    %p105 = por %p103, %p104
    %p107 = scmp.ne.s32.totalorder %s92, %s106
    %p108 = scmp.eq.s32.totalorder %s19, 0
    %p109 = por %p107, %p108
    %s111 = sadd.s32 %s110, 1
    %p114 = scmp.eq.s32.totalorder %s13, 1
    %p115 = scmp.ne.s32.totalorder %s110, %s112
    %p116 = scmp.eq.s32.totalorder %s13, 0
    %p117 = por %p115, %p116
    %p118 = scmp.ne.s32.totalorder %s110, %s112
    %p119 = scmp.eq.s32.totalorder %s18, 1
    %p120 = por %p118, %p119
    %p121 = scmp.ne.s32.totalorder %s112, %s113
    %p122 = scmp.eq.s32.totalorder %s18, 0
    %p123 = por %p121, %p122
    %p124 = scmp.ne.s32.totalorder %s112, %s113
    %p125 = scmp.eq.s32.totalorder %s19, 1
    %p126 = por %p124, %p125
    %p128 = scmp.ne.s32.totalorder %s113, %s127
    %p129 = scmp.eq.s32.totalorder %s19, 0
    %p130 = por %p128, %p129
    %s132 = sadd.s32 %s131, 1
    %p135 = scmp.eq.s32.totalorder %s13, 1
    %p136 = scmp.ne.s32.totalorder %s131, %s133
    %p137 = scmp.eq.s32.totalorder %s13, 0
    %p138 = por %p136, %p137
    %p139 = scmp.ne.s32.totalorder %s131, %s133
    %p140 = scmp.eq.s32.totalorder %s18, 1
    %p141 = por %p139, %p140
    %p142 = scmp.ne.s32.totalorder %s133, %s134
    %p143 = scmp.eq.s32.totalorder %s18, 0
    %p144 = por %p142, %p143
    %p145 = scmp.ne.s32.totalorder %s133, %s134
    %p146 = scmp.eq.s32.totalorder %s19, 1
    %p147 = por %p145, %p146
    %p149 = scmp.ne.s32.totalorder %s134, %s148
    %p150 = scmp.eq.s32.totalorder %s19, 0
    %p151 = por %p149, %p150
    %s153 = sadd.s32 %s152, 1
    %p156 = scmp.eq.s32.totalorder %s13, 1
    %p157 = scmp.ne.s32.totalorder %s152, %s154
    %p158 = scmp.eq.s32.totalorder %s13, 0
    %p159 = por %p157, %p158
    %p160 = scmp.ne.s32.totalorder %s152, %s154
    %p161 = scmp.eq.s32.totalorder %s18, 1
    %p162 = por %p160, %p161
    %p163 = scmp.ne.s32.totalorder %s154, %s155
    %p164 = scmp.eq.s32.totalorder %s18, 0
    %p165 = por %p163, %p164
    %p166 = scmp.ne.s32.totalorder %s154, %s155
    %p167 = scmp.eq.s32.totalorder %s19, 1
    %p168 = por %p166, %p167
    %p170 = scmp.ne.s32.totalorder %s155, %s169
    %p171 = scmp.eq.s32.totalorder %s19, 0
    %p172 = por %p170, %p171
    %s173 = ssub.s32 %s13, %s20
    %p174 = scmp.eq.s32.totalorder %s173, 0
    %s176 = sadd.s32 %s175, 1
    %s177 = scalar_select %p174, %s175, %s176
    %p180 = pneg %p174
    %p181 = scmp.eq.s32.totalorder %s13, 1
    %p182 = por %p180, %p181
    %p183 = scmp.ne.s32.totalorder %s175, %s178
    %p184 = scmp.eq.s32.totalorder %s13, 0
    %p185 = por %p183, %p184
    %p186 = scmp.ne.s32.totalorder %s175, %s178
    %p187 = scmp.eq.s32.totalorder %s18, 1
    %p188 = por %p186, %p187
    %p189 = scmp.ne.s32.totalorder %s178, %s179
    %p190 = scmp.eq.s32.totalorder %s18, 0
    %p191 = por %p189, %p190
    %p192 = scmp.ne.s32.totalorder %s178, %s179
    %p193 = scmp.eq.s32.totalorder %s19, 1
    %p194 = por %p192, %p193
    %p196 = scmp.ne.s32.totalorder %s179, %s195
    %p197 = scmp.eq.s32.totalorder %s19, 0
    %p198 = por %p196, %p197
    %p199 = scmp.le.s32.totalorder 1, %s13
    %p200 = scmp.lt.s32.totalorder %s13, 3
    %p201 = pnand %p199, %p200
    %p202 = pneg %p201
    // Predicated region
    $region9: #{forward.1} parent=5 // pred_check
      _
    $region10: #{forward.1} parent=5 // pred_check_branch
      %204 = sbr.rel (%p201) target = $region12
    $region11: #{forward.1} parent=5 // pred_region
      %s205 = ssub.s32 %s13, 1
      // Predicated region
      $region13: #{forward.1} parent=11 // pred_check
        %p206 = pneg %p60
      $region14: #{forward.1} parent=11 // pred_check_branch
        %208 = sbr.rel (%p206) target = $region16
      $region15: #{forward.1} parent=11 // pred_region
        _
      $region16: #{forward.1} parent=11 // pred_fallthru
        _
      // Predicated region
      $region17: #{forward.1} parent=11 // pred_check
        %p209 = pneg %p81
      $region18: #{forward.1} parent=11 // pred_check_branch
        %211 = sbr.rel (%p209) target = $region20
      $region19: #{forward.1} parent=11 // pred_region
        _
      $region20: #{forward.1} parent=11 // pred_fallthru
        _
      // Predicated region
      $region21: #{forward.1} parent=11 // pred_check
        %p212 = pneg %p102
      $region22: #{forward.1} parent=11 // pred_check_branch
        %214 = sbr.rel (%p212) target = $region24
      $region23: #{forward.1} parent=11 // pred_region
        _
      $region24: #{forward.1} parent=11 // pred_fallthru
        _
      // Predicated region
      $region25: #{forward.1} parent=11 // pred_check
        %p215 = pneg %p123
      $region26: #{forward.1} parent=11 // pred_check_branch
        %217 = sbr.rel (%p215) target = $region28
      $region27: #{forward.1} parent=11 // pred_region
        _
      $region28: #{forward.1} parent=11 // pred_fallthru
        _
      // Predicated region
      $region29: #{forward.1} parent=11 // pred_check
        %p218 = pneg %p144
      $region30: #{forward.1} parent=11 // pred_check_branch
        %220 = sbr.rel (%p218) target = $region32
      $region31: #{forward.1} parent=11 // pred_region
        _
      $region32: #{forward.1} parent=11 // pred_fallthru
        _
      // Predicated region
      $region33: #{forward.1} parent=11 // pred_check
        %p221 = pneg %p165
      $region34: #{forward.1} parent=11 // pred_check_branch
        %223 = sbr.rel (%p221) target = $region36
      $region35: #{forward.1} parent=11 // pred_region
        _
      $region36: #{forward.1} parent=11 // pred_fallthru
        _
    $region12: #{forward.1} parent=5 // pred_fallthru
      _
    %p224 = scmp.lt.s32.totalorder %s13, 2
    // Predicated region
    $region37: #{forward.1} parent=5 // pred_check
      %p225 = pneg %p224
    $region38: #{forward.1} parent=5 // pred_check_branch
      %227 = sbr.rel (%p225) target = $region40
    $region39: #{forward.1} parent=5 // pred_region
      // Predicated region
      $region41: #{forward.1} parent=39 // pred_check
        %p228 = pneg %p33
      $region42: #{forward.1} parent=39 // pred_check_branch
        %230 = sbr.rel (%p228) target = $region44
      $region43: #{forward.1} parent=39 // pred_region
        %s231 = smul.u32 16, %s13
        %p232 = scmp.lt.s32.totalorder %s231, 31
        %s233 = scalar_select %p232, %s231, 31
        %s234 = smul.addr %s233, 8
        %s235 = scalar_lea.vmem %s0, %s234
        %s236 = smul.u32 16, %s13
      $region44: #{forward.1} parent=39 // pred_fallthru
        _
    $region40: #{forward.1} parent=5 // pred_fallthru
      _
    %p237 = scmp.le.s32.totalorder 1, %s13
    %p238 = scmp.lt.s32.totalorder %s13, 3
    %p239 = pnand %p237, %p238
    %p240 = pneg %p239
    // Predicated region
    $region45: #{forward.1} parent=5 // pred_check
      _
    $region46: #{forward.1} parent=5 // pred_check_branch
      %242 = sbr.rel (%p239) target = $region48
    $region47: #{forward.1} parent=5 // pred_region
      %s243 = ssub.s32 %s13, 1
      %s244 = smul.u32 16, %s18
      %p245 = scmp.lt.s32.totalorder %s244, 31
      %s246 = scalar_select %p245, %s244, 31
      %s247 = smul.addr %s246, 8
      %s248 = scalar_lea.vmem %s0, %s247
      %p249 = pneg %p39
      %p250 = pneg %p36
      %p251 = pneg %p60
      %p252 = pneg %p57
      %p253 = pneg %p81
      %p254 = pneg %p78
      %p255 = pneg %p102
      %p256 = pneg %p99
      %p257 = pneg %p123
      %p258 = pneg %p120
      %p259 = pneg %p144
      %p260 = pneg %p141
      %p261 = pneg %p165
      %p262 = pneg %p162
      %p263 = pneg %p191
      %p264 = pneg %p188
      %s265 = smul.u32 16, %s18
      %p266 = scmp.lt.s32.totalorder %s265, 31
      %s267 = scalar_select %p266, %s265, 31
      %s268 = smul.addr %s267, 8
      %s269 = scalar_lea.vmem %s7, %s268
      %s270 = smul.u32 16, %s18
      %p271 = scmp.lt.s32.totalorder %s270, 31
      %s272 = scalar_select %p271, %s270, 31
      %s273 = smul.addr %s272, 8
      %s274 = scalar_lea.vmem %s0, %s273
      %s275 = smul.u32 16, %s18
      %s276 = smul.u32 16, %s18
      %p277 = scmp.lt.s32.totalorder %s276, 31
      %s278 = scalar_select %p277, %s276, 31
      %s279 = smul.addr %s278, 8
      %s280 = scalar_lea.vmem %s7, %s279
      %s281 = smul.u32 16, %s18
      %v283 = vld [vmem:[%s274] sm:$0xff]
      %v284 = vld [vmem:[%s274 + $0x8] sm:$0xff]
      %v285 = vld [vmem:[%s274 + $0x10] sm:$0xff]
      %v286 = vld [vmem:[%s274 + $0x18] sm:$0xff]
      %v287 = vld [vmem:[%s274 + $0x20] sm:$0xff]
      %v288 = vld [vmem:[%s274 + $0x28] sm:$0xff]
      %v289 = vld [vmem:[%s274 + $0x30] sm:$0xff]
      %v290 = vld [vmem:[%s274 + $0x38] sm:$0xff]
      %v291 = vld [vmem:[%s274 + $0x40] sm:$0xff]
      %v292 = vld [vmem:[%s274 + $0x48] sm:$0xff]
      %v293 = vld [vmem:[%s274 + $0x50] sm:$0xff]
      %v294 = vld [vmem:[%s274 + $0x58] sm:$0xff]
      %v295 = vld [vmem:[%s274 + $0x60] sm:$0xff]
      %v296 = vld [vmem:[%s274 + $0x68] sm:$0xff]
      %v297 = vld [vmem:[%s274 + $0x70] sm:$0xff]
      %v298 = vld [vmem:[%s274 + $0x78] sm:$0xff]
      %v299 = vpack.c.bf16 %v284, %v283
      %v300 = vpack.c.bf16 %v286, %v285
      %v301 = vpack.c.bf16 %v288, %v287
      %v302 = vpack.c.bf16 %v290, %v289
      %v303 = vpack.c.bf16 %v292, %v291
      %v304 = vpack.c.bf16 %v294, %v293
      %v305 = vpack.c.bf16 %v296, %v295
      %v306 = vpack.c.bf16 %v298, %v297
      %v307 = vld [vmem:[%s1] sm:$0xf]
      %v308 = vld [vmem:[%s1 + $0x4] sm:$0xf]
      %v309 = vld [vmem:[%s2] sm:$0x1]
      %v311 = vlaneseq
      %v312 = vshrl.u32 %v311, 7
      %v313 = vsub.s32 0, %v312
      %v314 = vrot.slane %v309, %v313
      %v318 = vunpack.c.l.b16 %v307
      %v319 = vunpack.c.l.b16 %v308
      %v320 = vpack.c.b16 %v319, %v318
      %vm322 = vcmask 130048
      %v324 = vsel %vm322, %v299, 0
      %v327 = vsel %vm322, %v300, 0
      %v330 = vsel %vm322, %v301, 0
      %v333 = vsel %vm322, %v302, 0
      %v336 = vsel %vm322, %v303, 0
      %v339 = vsel %vm322, %v304, 0
      %v342 = vsel %vm322, %v305, 0
      %v345 = vsel %vm322, %v306, 0
      %347 = vmatprep.subr.bf16.mxu0 0
      %348 = vmatpush1.bf16.msra.mxu0 0
      %349 = vmatprep.subr.bf16.mxu0 0
      %350 = vmatpush1.bf16.msra.mxu0 0
      %351 = vmatprep.subr.bf16.mxu0 0
      %352 = vmatpush1.bf16.msra.mxu0 0
      %353 = vmatprep.subr.bf16.mxu0 0
      %354 = vmatpush1.bf16.msra.mxu0 0
      %355 = vmatprep.subr.bf16.mxu0 0
      %356 = vmatpush1.bf16.msra.mxu0 0
      %357 = vmatprep.subr.bf16.mxu0 0
      %358 = vmatpush1.bf16.msra.mxu0 0
      %359 = vmatprep.subr.bf16.mxu0 0
      %360 = vmatpush1.bf16.msra.mxu0 0
      %361 = vmatprep.subr.bf16.mxu0 0
      %362 = vmatpush1.bf16.msra.mxu0 %v320
      %363 = vmatprep.subr.bf16.mxu0 0
      %364 = vmatpush2.bf16.msra.mxu0 0
      %365 = vmatprep.subr.bf16.mxu0 0
      %366 = vmatpush2.bf16.msra.mxu0 0
      %367 = vmatprep.subr.bf16.mxu0 0
      %368 = vmatpush2.bf16.msra.mxu0 0
      %369 = vmatprep.subr.bf16.mxu0 0
      %370 = vmatpush2.bf16.msra.mxu0 0
      %371 = vmatprep.subr.bf16.mxu0 0
      %372 = vmatpush2.bf16.msra.mxu0 0
      %373 = vmatprep.subr.bf16.mxu0 0
      %374 = vmatpush2.bf16.msra.mxu0 0
      %375 = vmatprep.subr.bf16.mxu0 0
      %376 = vmatpush2.bf16.msra.mxu0 0
      %377 = vmatprep.subr.bf16.mxu0 0
      %378 = vmatpush2.bf16.msra.mxu0 0
      %379 = vmatprep.mubr.bf16.mxu0 0
      %380 = vmatmul.mubr.bf16.gmra.mxu0 %v324
      %v381 = vpop.f32.mrf.mxu0
      %v382 = vadd.f32 %v314, %v381
      %v383 = vpop.f32.mrf.mxu0
      %v384 = vpop.f32.mrf.mxu0
      %v385 = vadd.f32 %v314, %v384
      %v386 = vpop.f32.mrf.mxu0
      %387 = vmatprep.mubr.bf16.mxu0 0
      %388 = vmatmul.mubr.bf16.gmra.mxu0 %v327
      %v389 = vpop.f32.mrf.mxu0
      %v390 = vadd.f32 %v314, %v389
      %v391 = vpop.f32.mrf.mxu0
      %v392 = vpop.f32.mrf.mxu0
      %v393 = vadd.f32 %v314, %v392
      %v394 = vpop.f32.mrf.mxu0
      %395 = vmatprep.mubr.bf16.mxu0 0
      %396 = vmatmul.mubr.bf16.gmra.mxu0 %v330
      %v397 = vpop.f32.mrf.mxu0
      %v398 = vadd.f32 %v314, %v397
      %v399 = vpop.f32.mrf.mxu0
      %v400 = vpop.f32.mrf.mxu0
      %v401 = vadd.f32 %v314, %v400
      %v402 = vpop.f32.mrf.mxu0
      %403 = vmatprep.mubr.bf16.mxu0 0
      %404 = vmatmul.mubr.bf16.gmra.mxu0 %v333
      %v405 = vpop.f32.mrf.mxu0
      %v406 = vadd.f32 %v314, %v405
      %v407 = vpop.f32.mrf.mxu0
      %v408 = vpop.f32.mrf.mxu0
      %v409 = vadd.f32 %v314, %v408
      %v410 = vpop.f32.mrf.mxu0
      %411 = vmatprep.mubr.bf16.mxu0 0
      %412 = vmatmul.mubr.bf16.gmra.mxu0 %v336
      %v413 = vpop.f32.mrf.mxu0
      %v414 = vadd.f32 %v314, %v413
      %v415 = vpop.f32.mrf.mxu0
      %v416 = vpop.f32.mrf.mxu0
      %v417 = vadd.f32 %v314, %v416
      %v418 = vpop.f32.mrf.mxu0
      %419 = vmatprep.mubr.bf16.mxu0 0
      %420 = vmatmul.mubr.bf16.gmra.mxu0 %v339
      %v421 = vpop.f32.mrf.mxu0
      %v422 = vadd.f32 %v314, %v421
      %v423 = vpop.f32.mrf.mxu0
      %v424 = vpop.f32.mrf.mxu0
      %v425 = vadd.f32 %v314, %v424
      %v426 = vpop.f32.mrf.mxu0
      %427 = vmatprep.mubr.bf16.mxu0 0
      %428 = vmatmul.mubr.bf16.gmra.mxu0 %v342
      %v429 = vpop.f32.mrf.mxu0
      %v430 = vadd.f32 %v314, %v429
      %v431 = vpop.f32.mrf.mxu0
      %v432 = vpop.f32.mrf.mxu0
      %v433 = vadd.f32 %v314, %v432
      %v434 = vpop.f32.mrf.mxu0
      %435 = vmatprep.mubr.bf16.mxu0 0
      %436 = vmatmul.mubr.bf16.gmra.mxu0 %v345
      %v437 = vpop.f32.mrf.mxu0
      %v438 = vadd.f32 %v314, %v437
      %v439 = vpop.f32.mrf.mxu0
      %v440 = vpop.f32.mrf.mxu0
      %v441 = vadd.f32 %v314, %v440
      %v442 = vpop.f32.mrf.mxu0
      %443 = vdwg.mxu0
      %v444 = vmax.f32 %v382, 0.0
      %v445 = vmax.f32 %v385, 0.0
      %v446 = vmax.f32 %v390, 0.0
      %v447 = vmax.f32 %v393, 0.0
      %v448 = vmax.f32 %v398, 0.0
      %v449 = vmax.f32 %v401, 0.0
      %v450 = vmax.f32 %v406, 0.0
      %v451 = vmax.f32 %v409, 0.0
      %v452 = vmax.f32 %v414, 0.0
      %v453 = vmax.f32 %v417, 0.0
      %v454 = vmax.f32 %v422, 0.0
      %v455 = vmax.f32 %v425, 0.0
      %v456 = vmax.f32 %v430, 0.0
      %v457 = vmax.f32 %v433, 0.0
      %v458 = vmax.f32 %v438, 0.0
      %v459 = vmax.f32 %v441, 0.0
      %v460 = vpack.c.bf16 %v445, %v444
      %v461 = vpack.c.bf16 %v447, %v446
      %v462 = vpack.c.bf16 %v449, %v448
      %v463 = vpack.c.bf16 %v451, %v450
      %v464 = vpack.c.bf16 %v453, %v452
      %v465 = vpack.c.bf16 %v455, %v454
      %v466 = vpack.c.bf16 %v457, %v456
      %v467 = vpack.c.bf16 %v459, %v458
      %v468 = vld [vmem:[%s3] sm:$0xf]
      %v469 = vld [vmem:[%s3 + $0x4] sm:$0xf]
      %v470 = vld [vmem:[%s3 + $0x8] sm:$0xf]
      %v471 = vld [vmem:[%s3 + $0xc] sm:$0xf]
      %v472 = vld [vmem:[%s3 + $0x10] sm:$0xf]
      %v473 = vld [vmem:[%s3 + $0x14] sm:$0xf]
      %v474 = vld [vmem:[%s3 + $0x18] sm:$0xf]
      %v475 = vld [vmem:[%s3 + $0x1c] sm:$0xf]
      %v476 = vld [vmem:[%s3 + $0x20] sm:$0xf]
      %v477 = vld [vmem:[%s3 + $0x24] sm:$0xf]
      %v478 = vld [vmem:[%s3 + $0x28] sm:$0xf]
      %v479 = vld [vmem:[%s3 + $0x2c] sm:$0xf]
      %v480 = vld [vmem:[%s3 + $0x30] sm:$0xf]
      %v481 = vld [vmem:[%s3 + $0x34] sm:$0xf]
      %v482 = vld [vmem:[%s3 + $0x38] sm:$0xf]
      %v483 = vld [vmem:[%s3 + $0x3c] sm:$0xf]
      %v484 = vld [vmem:[%s4] sm:$0x1]
      %v486 = vlaneseq
      %v487 = vshrl.u32 %v486, 7
      %v488 = vsub.s32 0, %v487
      %v489 = vrot.slane %v484, %v488
      %v507 = vunpack.c.l.b16 %v468
      %v508 = vunpack.c.l.b16 %v469
      %v509 = vunpack.c.l.b16 %v470
      %v510 = vunpack.c.l.b16 %v471
      %v511 = vunpack.c.l.b16 %v472
      %v512 = vunpack.c.l.b16 %v473
      %v513 = vunpack.c.l.b16 %v474
      %v514 = vunpack.c.l.b16 %v475
      %v515 = vunpack.c.l.b16 %v476
      %v516 = vunpack.c.l.b16 %v477
      %v517 = vunpack.c.l.b16 %v478
      %v518 = vunpack.c.l.b16 %v479
      %v519 = vunpack.c.l.b16 %v480
      %v520 = vunpack.c.l.b16 %v481
      %v521 = vunpack.c.l.b16 %v482
      %v522 = vunpack.c.l.b16 %v483
      %v523 = vpack.c.b16 %v508, %v507
      %v524 = vpack.c.b16 %v510, %v509
      %v525 = vpack.c.b16 %v512, %v511
      %v526 = vpack.c.b16 %v514, %v513
      %v527 = vpack.c.b16 %v516, %v515
      %v528 = vpack.c.b16 %v518, %v517
      %v529 = vpack.c.b16 %v520, %v519
      %v530 = vpack.c.b16 %v522, %v521
      %539 = vmatprep.subr.bf16.mxu0 0
      %540 = vmatpush1.bf16.msra.mxu0 %v530
      %541 = vmatprep.subr.bf16.mxu0 0
      %542 = vmatpush1.bf16.msra.mxu0 %v529
      %543 = vmatprep.subr.bf16.mxu0 0
      %544 = vmatpush1.bf16.msra.mxu0 %v528
      %545 = vmatprep.subr.bf16.mxu0 0
      %546 = vmatpush1.bf16.msra.mxu0 %v527
      %547 = vmatprep.subr.bf16.mxu0 0
      %548 = vmatpush1.bf16.msra.mxu0 %v526
      %549 = vmatprep.subr.bf16.mxu0 0
      %550 = vmatpush1.bf16.msra.mxu0 %v525
      %551 = vmatprep.subr.bf16.mxu0 0
      %552 = vmatpush1.bf16.msra.mxu0 %v524
      %553 = vmatprep.subr.bf16.mxu0 0
      %554 = vmatpush1.bf16.msra.mxu0 %v523
      %555 = vmatprep.subr.bf16.mxu0 0
      %556 = vmatpush2.bf16.msra.mxu0 0
      %557 = vmatprep.subr.bf16.mxu0 0
      %558 = vmatpush2.bf16.msra.mxu0 0
      %559 = vmatprep.subr.bf16.mxu0 0
      %560 = vmatpush2.bf16.msra.mxu0 0
      %561 = vmatprep.subr.bf16.mxu0 0
      %562 = vmatpush2.bf16.msra.mxu0 0
      %563 = vmatprep.subr.bf16.mxu0 0
      %564 = vmatpush2.bf16.msra.mxu0 0
      %565 = vmatprep.subr.bf16.mxu0 0
      %566 = vmatpush2.bf16.msra.mxu0 0
      %567 = vmatprep.subr.bf16.mxu0 0
      %568 = vmatpush2.bf16.msra.mxu0 0
      %569 = vmatprep.subr.bf16.mxu0 0
      %570 = vmatpush2.bf16.msra.mxu0 0
      %571 = vmatprep.mubr.bf16.mxu0 0
      %572 = vmatmul.mubr.bf16.gmra.mxu0 %v460
      %v573 = vpop.f32.mrf.mxu0
      %v574 = vadd.f32 %v489, %v573
      %v575 = vpop.f32.mrf.mxu0
      %v576 = vpop.f32.mrf.mxu0
      %v577 = vadd.f32 %v489, %v576
      %v578 = vpop.f32.mrf.mxu0
      %579 = vmatprep.mubr.bf16.mxu0 0
      %580 = vmatmul.mubr.bf16.gmra.mxu0 %v461
      %v581 = vpop.f32.mrf.mxu0
      %v582 = vadd.f32 %v489, %v581
      %v583 = vpop.f32.mrf.mxu0
      %v584 = vpop.f32.mrf.mxu0
      %v585 = vadd.f32 %v489, %v584
      %v586 = vpop.f32.mrf.mxu0
      %587 = vmatprep.mubr.bf16.mxu0 0
      %588 = vmatmul.mubr.bf16.gmra.mxu0 %v462
      %v589 = vpop.f32.mrf.mxu0
      %v590 = vadd.f32 %v489, %v589
      %v591 = vpop.f32.mrf.mxu0
      %v592 = vpop.f32.mrf.mxu0
      %v593 = vadd.f32 %v489, %v592
      %v594 = vpop.f32.mrf.mxu0
      %595 = vmatprep.mubr.bf16.mxu0 0
      %596 = vmatmul.mubr.bf16.gmra.mxu0 %v463
      %v597 = vpop.f32.mrf.mxu0
      %v598 = vadd.f32 %v489, %v597
      %v599 = vpop.f32.mrf.mxu0
      %v600 = vpop.f32.mrf.mxu0
      %v601 = vadd.f32 %v489, %v600
      %v602 = vpop.f32.mrf.mxu0
      %603 = vmatprep.mubr.bf16.mxu0 0
      %604 = vmatmul.mubr.bf16.gmra.mxu0 %v464
      %v605 = vpop.f32.mrf.mxu0
      %v606 = vadd.f32 %v489, %v605
      %v607 = vpop.f32.mrf.mxu0
      %v608 = vpop.f32.mrf.mxu0
      %v609 = vadd.f32 %v489, %v608
      %v610 = vpop.f32.mrf.mxu0
      %611 = vmatprep.mubr.bf16.mxu0 0
      %612 = vmatmul.mubr.bf16.gmra.mxu0 %v465
      %v613 = vpop.f32.mrf.mxu0
      %v614 = vadd.f32 %v489, %v613
      %v615 = vpop.f32.mrf.mxu0
      %v616 = vpop.f32.mrf.mxu0
      %v617 = vadd.f32 %v489, %v616
      %v618 = vpop.f32.mrf.mxu0
      %619 = vmatprep.mubr.bf16.mxu0 0
      %620 = vmatmul.mubr.bf16.gmra.mxu0 %v466
      %v621 = vpop.f32.mrf.mxu0
      %v622 = vadd.f32 %v489, %v621
      %v623 = vpop.f32.mrf.mxu0
      %v624 = vpop.f32.mrf.mxu0
      %v625 = vadd.f32 %v489, %v624
      %v626 = vpop.f32.mrf.mxu0
      %627 = vmatprep.mubr.bf16.mxu0 0
      %628 = vmatmul.mubr.bf16.gmra.mxu0 %v467
      %v629 = vpop.f32.mrf.mxu0
      %v630 = vadd.f32 %v489, %v629
      %v631 = vpop.f32.mrf.mxu0
      %v632 = vpop.f32.mrf.mxu0
      %v633 = vadd.f32 %v489, %v632
      %v634 = vpop.f32.mrf.mxu0
      %635 = vdwg.mxu0
      %v636 = vmax.f32 %v574, 0.0
      %v637 = vmax.f32 %v577, 0.0
      %v638 = vmax.f32 %v582, 0.0
      %v639 = vmax.f32 %v585, 0.0
      %v640 = vmax.f32 %v590, 0.0
      %v641 = vmax.f32 %v593, 0.0
      %v642 = vmax.f32 %v598, 0.0
      %v643 = vmax.f32 %v601, 0.0
      %v644 = vmax.f32 %v606, 0.0
      %v645 = vmax.f32 %v609, 0.0
      %v646 = vmax.f32 %v614, 0.0
      %v647 = vmax.f32 %v617, 0.0
      %v648 = vmax.f32 %v622, 0.0
      %v649 = vmax.f32 %v625, 0.0
      %v650 = vmax.f32 %v630, 0.0
      %v651 = vmax.f32 %v633, 0.0
      %v652 = vpack.c.bf16 %v637, %v636
      %v653 = vpack.c.bf16 %v639, %v638
      %v654 = vpack.c.bf16 %v641, %v640
      %v655 = vpack.c.bf16 %v643, %v642
      %v656 = vpack.c.bf16 %v645, %v644
      %v657 = vpack.c.bf16 %v647, %v646
      %v658 = vpack.c.bf16 %v649, %v648
      %v659 = vpack.c.bf16 %v651, %v650
      %v660 = vld [vmem:[%s5] sm:$0xf]
      %v661 = vld [vmem:[%s5 + $0x4] sm:$0xf]
      %v662 = vld [vmem:[%s5 + $0x8] sm:$0xf]
      %v663 = vld [vmem:[%s5 + $0xc] sm:$0xf]
      %v664 = vld [vmem:[%s5 + $0x10] sm:$0xf]
      %v665 = vld [vmem:[%s5 + $0x14] sm:$0xf]
      %v666 = vld [vmem:[%s5 + $0x18] sm:$0xf]
      %v667 = vld [vmem:[%s5 + $0x1c] sm:$0xf]
      %v668 = vld [vmem:[%s5 + $0x20] sm:$0xf]
      %v669 = vld [vmem:[%s5 + $0x24] sm:$0xf]
      %v670 = vld [vmem:[%s5 + $0x28] sm:$0xf]
      %v671 = vld [vmem:[%s5 + $0x2c] sm:$0xf]
      %v672 = vld [vmem:[%s5 + $0x30] sm:$0xf]
      %v673 = vld [vmem:[%s5 + $0x34] sm:$0xf]
      %v674 = vld [vmem:[%s5 + $0x38] sm:$0xf]
      %v675 = vld [vmem:[%s5 + $0x3c] sm:$0xf]
      %v676 = vld [vmem:[%s6] sm:$0x1]
      %v678 = vlaneseq
      %v679 = vshrl.u32 %v678, 7
      %v680 = vsub.s32 0, %v679
      %v681 = vrot.slane %v676, %v680
      %v699 = vunpack.c.l.b16 %v660
      %v700 = vunpack.c.l.b16 %v661
      %v701 = vunpack.c.l.b16 %v662
      %v702 = vunpack.c.l.b16 %v663
      %v703 = vunpack.c.l.b16 %v664
      %v704 = vunpack.c.l.b16 %v665
      %v705 = vunpack.c.l.b16 %v666
      %v706 = vunpack.c.l.b16 %v667
      %v707 = vunpack.c.l.b16 %v668
      %v708 = vunpack.c.l.b16 %v669
      %v709 = vunpack.c.l.b16 %v670
      %v710 = vunpack.c.l.b16 %v671
      %v711 = vunpack.c.l.b16 %v672
      %v712 = vunpack.c.l.b16 %v673
      %v713 = vunpack.c.l.b16 %v674
      %v714 = vunpack.c.l.b16 %v675
      %v715 = vpack.c.b16 %v700, %v699
      %v716 = vpack.c.b16 %v702, %v701
      %v717 = vpack.c.b16 %v704, %v703
      %v718 = vpack.c.b16 %v706, %v705
      %v719 = vpack.c.b16 %v708, %v707
      %v720 = vpack.c.b16 %v710, %v709
      %v721 = vpack.c.b16 %v712, %v711
      %v722 = vpack.c.b16 %v714, %v713
      %731 = vmatprep.subr.bf16.mxu0 0
      %732 = vmatpush1.bf16.msra.mxu0 %v722
      %733 = vmatprep.subr.bf16.mxu0 0
      %734 = vmatpush1.bf16.msra.mxu0 %v721
      %735 = vmatprep.subr.bf16.mxu0 0
      %736 = vmatpush1.bf16.msra.mxu0 %v720
      %737 = vmatprep.subr.bf16.mxu0 0
      %738 = vmatpush1.bf16.msra.mxu0 %v719
      %739 = vmatprep.subr.bf16.mxu0 0
      %740 = vmatpush1.bf16.msra.mxu0 %v718
      %741 = vmatprep.subr.bf16.mxu0 0
      %742 = vmatpush1.bf16.msra.mxu0 %v717
      %743 = vmatprep.subr.bf16.mxu0 0
      %744 = vmatpush1.bf16.msra.mxu0 %v716
      %745 = vmatprep.subr.bf16.mxu0 0
      %746 = vmatpush1.bf16.msra.mxu0 %v715
      %747 = vmatprep.subr.bf16.mxu0 0
      %748 = vmatpush2.bf16.msra.mxu0 0
      %749 = vmatprep.subr.bf16.mxu0 0
      %750 = vmatpush2.bf16.msra.mxu0 0
      %751 = vmatprep.subr.bf16.mxu0 0
      %752 = vmatpush2.bf16.msra.mxu0 0
      %753 = vmatprep.subr.bf16.mxu0 0
      %754 = vmatpush2.bf16.msra.mxu0 0
      %755 = vmatprep.subr.bf16.mxu0 0
      %756 = vmatpush2.bf16.msra.mxu0 0
      %757 = vmatprep.subr.bf16.mxu0 0
      %758 = vmatpush2.bf16.msra.mxu0 0
      %759 = vmatprep.subr.bf16.mxu0 0
      %760 = vmatpush2.bf16.msra.mxu0 0
      %761 = vmatprep.subr.bf16.mxu0 0
      %762 = vmatpush2.bf16.msra.mxu0 0
      %763 = vmatprep.mubr.bf16.mxu0 0
      %764 = vmatmul.mubr.bf16.gmra.mxu0 %v652
      %v765 = vpop.f32.mrf.mxu0
      %v766 = vadd.f32 %v681, %v765
      %v767 = vpop.f32.mrf.mxu0
      %v768 = vpop.f32.mrf.mxu0
      %v769 = vadd.f32 %v681, %v768
      %v770 = vpop.f32.mrf.mxu0
      %771 = vmatprep.mubr.bf16.mxu0 0
      %772 = vmatmul.mubr.bf16.gmra.mxu0 %v653
      %v773 = vpop.f32.mrf.mxu0
      %v774 = vadd.f32 %v681, %v773
      %v775 = vpop.f32.mrf.mxu0
      %v776 = vpop.f32.mrf.mxu0
      %v777 = vadd.f32 %v681, %v776
      %v778 = vpop.f32.mrf.mxu0
      %779 = vmatprep.mubr.bf16.mxu0 0
      %780 = vmatmul.mubr.bf16.gmra.mxu0 %v654
      %v781 = vpop.f32.mrf.mxu0
      %v782 = vadd.f32 %v681, %v781
      %v783 = vpop.f32.mrf.mxu0
      %v784 = vpop.f32.mrf.mxu0
      %v785 = vadd.f32 %v681, %v784
      %v786 = vpop.f32.mrf.mxu0
      %787 = vmatprep.mubr.bf16.mxu0 0
      %788 = vmatmul.mubr.bf16.gmra.mxu0 %v655
      %v789 = vpop.f32.mrf.mxu0
      %v790 = vadd.f32 %v681, %v789
      %v791 = vpop.f32.mrf.mxu0
      %v792 = vpop.f32.mrf.mxu0
      %v793 = vadd.f32 %v681, %v792
      %v794 = vpop.f32.mrf.mxu0
      %795 = vmatprep.mubr.bf16.mxu0 0
      %796 = vmatmul.mubr.bf16.gmra.mxu0 %v656
      %v797 = vpop.f32.mrf.mxu0
      %v798 = vadd.f32 %v681, %v797
      %v799 = vpop.f32.mrf.mxu0
      %v800 = vpop.f32.mrf.mxu0
      %v801 = vadd.f32 %v681, %v800
      %v802 = vpop.f32.mrf.mxu0
      %803 = vmatprep.mubr.bf16.mxu0 0
      %804 = vmatmul.mubr.bf16.gmra.mxu0 %v657
      %v805 = vpop.f32.mrf.mxu0
      %v806 = vadd.f32 %v681, %v805
      %v807 = vpop.f32.mrf.mxu0
      %v808 = vpop.f32.mrf.mxu0
      %v809 = vadd.f32 %v681, %v808
      %v810 = vpop.f32.mrf.mxu0
      %811 = vmatprep.mubr.bf16.mxu0 0
      %812 = vmatmul.mubr.bf16.gmra.mxu0 %v658
      %v813 = vpop.f32.mrf.mxu0
      %v814 = vadd.f32 %v681, %v813
      %v815 = vpop.f32.mrf.mxu0
      %v816 = vpop.f32.mrf.mxu0
      %v817 = vadd.f32 %v681, %v816
      %v818 = vpop.f32.mrf.mxu0
      %819 = vmatprep.mubr.bf16.mxu0 0
      %820 = vmatmul.mubr.bf16.gmra.mxu0 %v659
      %v821 = vpop.f32.mrf.mxu0
      %v822 = vadd.f32 %v681, %v821
      %v823 = vpop.f32.mrf.mxu0
      %v824 = vpop.f32.mrf.mxu0
      %v825 = vadd.f32 %v681, %v824
      %v826 = vpop.f32.mrf.mxu0
      %827 = vdwg.mxu0
      %828 = vmax.xlane.f32.xlu0 %v766
      %v829 = vpop.xlane.xlu0 %828
      %830 = vmax.xlane.f32.xlu0 %v769
      %v831 = vpop.xlane.xlu0 %830
      %832 = vmax.xlane.f32.xlu0 %v774
      %v833 = vpop.xlane.xlu0 %832
      %834 = vmax.xlane.f32.xlu0 %v777
      %v835 = vpop.xlane.xlu0 %834
      %836 = vmax.xlane.f32.xlu0 %v782
      %v837 = vpop.xlane.xlu0 %836
      %838 = vmax.xlane.f32.xlu0 %v785
      %v839 = vpop.xlane.xlu0 %838
      %840 = vmax.xlane.f32.xlu0 %v790
      %v841 = vpop.xlane.xlu0 %840
      %842 = vmax.xlane.f32.xlu0 %v793
      %v843 = vpop.xlane.xlu0 %842
      %844 = vmax.xlane.f32.xlu0 %v798
      %v845 = vpop.xlane.xlu0 %844
      %846 = vmax.xlane.f32.xlu0 %v801
      %v847 = vpop.xlane.xlu0 %846
      %848 = vmax.xlane.f32.xlu0 %v806
      %v849 = vpop.xlane.xlu0 %848
      %850 = vmax.xlane.f32.xlu0 %v809
      %v851 = vpop.xlane.xlu0 %850
      %852 = vmax.xlane.f32.xlu0 %v814
      %v853 = vpop.xlane.xlu0 %852
      %854 = vmax.xlane.f32.xlu0 %v817
      %v855 = vpop.xlane.xlu0 %854
      %856 = vmax.xlane.f32.xlu0 %v822
      %v857 = vpop.xlane.xlu0 %856
      %858 = vmax.xlane.f32.xlu0 %v825
      %v859 = vpop.xlane.xlu0 %858
      %v860 = vsub.f32 %v766, %v829
      %v861 = vsub.f32 %v769, %v831
      %v862 = vsub.f32 %v774, %v833
      %v863 = vsub.f32 %v777, %v835
      %v864 = vsub.f32 %v782, %v837
      %v865 = vsub.f32 %v785, %v839
      %v866 = vsub.f32 %v790, %v841
      %v867 = vsub.f32 %v793, %v843
      %v868 = vsub.f32 %v798, %v845
      %v869 = vsub.f32 %v801, %v847
      %v870 = vsub.f32 %v806, %v849
      %v871 = vsub.f32 %v809, %v851
      %v872 = vsub.f32 %v814, %v853
      %v873 = vsub.f32 %v817, %v855
      %v874 = vsub.f32 %v822, %v857
      %v875 = vsub.f32 %v825, %v859
      %v876 = vmul.f32 %v860, 1.442695
      %v877 = vpow.pop %v876
      %v878 = vmul.f32 %v861, 1.442695
      %v879 = vpow.pop %v878
      %v880 = vmul.f32 %v862, 1.442695
      %v881 = vpow.pop %v880
      %v882 = vmul.f32 %v863, 1.442695
      %v883 = vpow.pop %v882
      %v884 = vmul.f32 %v864, 1.442695
      %v885 = vpow.pop %v884
      %v886 = vmul.f32 %v865, 1.442695
      %v887 = vpow.pop %v886
      %v888 = vmul.f32 %v866, 1.442695
      %v889 = vpow.pop %v888
      %v890 = vmul.f32 %v867, 1.442695
      %v891 = vpow.pop %v890
      %v892 = vmul.f32 %v868, 1.442695
      %v893 = vpow.pop %v892
      %v894 = vmul.f32 %v869, 1.442695
      %v895 = vpow.pop %v894
      %v896 = vmul.f32 %v870, 1.442695
      %v897 = vpow.pop %v896
      %v898 = vmul.f32 %v871, 1.442695
      %v899 = vpow.pop %v898
      %v900 = vmul.f32 %v872, 1.442695
      %v901 = vpow.pop %v900
      %v902 = vmul.f32 %v873, 1.442695
      %v903 = vpow.pop %v902
      %v904 = vmul.f32 %v874, 1.442695
      %v905 = vpow.pop %v904
      %v906 = vmul.f32 %v875, 1.442695
      %v907 = vpow.pop %v906
      %908 = vadd.xlane.f32.xlu0 %v877
      %v909 = vpop.xlane.xlu0 %908
      %910 = vadd.xlane.f32.xlu0 %v879
      %v911 = vpop.xlane.xlu0 %910
      %912 = vadd.xlane.f32.xlu0 %v881
      %v913 = vpop.xlane.xlu0 %912
      %914 = vadd.xlane.f32.xlu0 %v883
      %v915 = vpop.xlane.xlu0 %914
      %916 = vadd.xlane.f32.xlu0 %v885
      %v917 = vpop.xlane.xlu0 %916
      %918 = vadd.xlane.f32.xlu0 %v887
      %v919 = vpop.xlane.xlu0 %918
      %920 = vadd.xlane.f32.xlu0 %v889
      %v921 = vpop.xlane.xlu0 %920
      %922 = vadd.xlane.f32.xlu0 %v891
      %v923 = vpop.xlane.xlu0 %922
      %924 = vadd.xlane.f32.xlu0 %v893
      %v925 = vpop.xlane.xlu0 %924
      %926 = vadd.xlane.f32.xlu0 %v895
      %v927 = vpop.xlane.xlu0 %926
      %928 = vadd.xlane.f32.xlu0 %v897
      %v929 = vpop.xlane.xlu0 %928
      %930 = vadd.xlane.f32.xlu0 %v899
      %v931 = vpop.xlane.xlu0 %930
      %932 = vadd.xlane.f32.xlu0 %v901
      %v933 = vpop.xlane.xlu0 %932
      %934 = vadd.xlane.f32.xlu0 %v903
      %v935 = vpop.xlane.xlu0 %934
      %936 = vadd.xlane.f32.xlu0 %v905
      %v937 = vpop.xlane.xlu0 %936
      %938 = vadd.xlane.f32.xlu0 %v907
      %v939 = vpop.xlane.xlu0 %938
      %v940 = vlog2.pop %v909
      %v941 = vmul.f32 %v940, 0.6931472
      %v942 = vlog2.pop %v911
      %v943 = vmul.f32 %v942, 0.6931472
      %v944 = vlog2.pop %v913
      %v945 = vmul.f32 %v944, 0.6931472
      %v946 = vlog2.pop %v915
      %v947 = vmul.f32 %v946, 0.6931472
      %v948 = vlog2.pop %v917
      %v949 = vmul.f32 %v948, 0.6931472
      %v950 = vlog2.pop %v919
      %v951 = vmul.f32 %v950, 0.6931472
      %v952 = vlog2.pop %v921
      %v953 = vmul.f32 %v952, 0.6931472
      %v954 = vlog2.pop %v923
      %v955 = vmul.f32 %v954, 0.6931472
      %v956 = vlog2.pop %v925
      %v957 = vmul.f32 %v956, 0.6931472
      %v958 = vlog2.pop %v927
      %v959 = vmul.f32 %v958, 0.6931472
      %v960 = vlog2.pop %v929
      %v961 = vmul.f32 %v960, 0.6931472
      %v962 = vlog2.pop %v931
      %v963 = vmul.f32 %v962, 0.6931472
      %v964 = vlog2.pop %v933
      %v965 = vmul.f32 %v964, 0.6931472
      %v966 = vlog2.pop %v935
      %v967 = vmul.f32 %v966, 0.6931472
      %v968 = vlog2.pop %v937
      %v969 = vmul.f32 %v968, 0.6931472
      %v970 = vlog2.pop %v939
      %v971 = vmul.f32 %v970, 0.6931472
      %v972 = vsub.f32 %v860, %v941
      %v973 = vsub.f32 %v861, %v943
      %v974 = vsub.f32 %v862, %v945
      %v975 = vsub.f32 %v863, %v947
      %v976 = vsub.f32 %v864, %v949
      %v977 = vsub.f32 %v865, %v951
      %v978 = vsub.f32 %v866, %v953
      %v979 = vsub.f32 %v867, %v955
      %v980 = vsub.f32 %v868, %v957
      %v981 = vsub.f32 %v869, %v959
      %v982 = vsub.f32 %v870, %v961
      %v983 = vsub.f32 %v871, %v963
      %v984 = vsub.f32 %v872, %v965
      %v985 = vsub.f32 %v873, %v967
      %v986 = vsub.f32 %v874, %v969
      %v987 = vsub.f32 %v875, %v971
      %988 = vst [vmem:[%s280] sm:$0xff] %v972
      %989 = vst [vmem:[%s280 + $0x8] sm:$0xff] %v973
      %990 = vst [vmem:[%s280 + $0x10] sm:$0xff] %v974
      %991 = vst [vmem:[%s280 + $0x18] sm:$0xff] %v975
      %992 = vst [vmem:[%s280 + $0x20] sm:$0xff] %v976
      %993 = vst [vmem:[%s280 + $0x28] sm:$0xff] %v977
      %994 = vst [vmem:[%s280 + $0x30] sm:$0xff] %v978
      %995 = vst [vmem:[%s280 + $0x38] sm:$0xff] %v979
      %996 = vst [vmem:[%s280 + $0x40] sm:$0xff] %v980
      %997 = vst [vmem:[%s280 + $0x48] sm:$0xff] %v981
      %998 = vst [vmem:[%s280 + $0x50] sm:$0xff] %v982
      %999 = vst [vmem:[%s280 + $0x58] sm:$0xff] %v983
      %1000 = vst [vmem:[%s280 + $0x60] sm:$0xff] %v984
      %1001 = vst [vmem:[%s280 + $0x68] sm:$0xff] %v985
      %1002 = vst [vmem:[%s280 + $0x70] sm:$0xff] %v986
      %1003 = vst [vmem:[%s280 + $0x78] sm:$0xff] %v987
      %s1004 = smul.u32 16, %s18
      %p1005 = scmp.lt.s32.totalorder %s1004, 31
      %s1006 = scalar_select %p1005, %s1004, 31
      %s1007 = smul.addr %s1006, 8
      %s1008 = scalar_lea.vmem %s7, %s1007
      // Predicated region
      $region49: #{forward.1} parent=47 // pred_check
        %p1009 = pneg %p188
      $region50: #{forward.1} parent=47 // pred_check_branch
        %1011 = sbr.rel (%p1009) target = $region52
      $region51: #{forward.1} parent=47 // pred_region
        %s1012 = smul.u32 16, %s18
      $region52: #{forward.1} parent=47 // pred_fallthru
        _
    $region48: #{forward.1} parent=5 // pred_fallthru
      _
    %p1013 = scmp.le.s32.totalorder 2, %s13
    // Predicated region
    $region53: #{forward.1} parent=5 // pred_check
      %p1014 = pneg %p1013
    $region54: #{forward.1} parent=5 // pred_check_branch
      %1016 = sbr.rel (%p1014) target = $region56
    $region55: #{forward.1} parent=5 // pred_region
      %s1017 = ssub.s32 %s13, 2
      // Predicated region
      $region57: #{forward.1} parent=55 // pred_check
        %p1018 = pneg %p194
      $region58: #{forward.1} parent=55 // pred_check_branch
        %1020 = sbr.rel (%p1018) target = $region60
      $region59: #{forward.1} parent=55 // pred_region
        %s1021 = smul.u32 16, %s19
        %p1022 = scmp.lt.s32.totalorder %s1021, 31
        %s1023 = scalar_select %p1022, %s1021, 31
        %s1024 = smul.addr %s1023, 8
        %s1025 = scalar_lea.vmem %s7, %s1024
      $region60: #{forward.1} parent=55 // pred_fallthru
        _
    $region56: #{forward.1} parent=5 // pred_fallthru
      _
  $region6: #{forward.1} parent=0 // loop_footer
    %s17 = sadd.s32 1, %s13
  $region7: #{forward.1} parent=0 // loop_footer_branch
    %12 = sbr.rel target = $region3
  $region8: #{forward.1} parent=0 // loop_exit
    _

// kernel: forward.1
$region0: #{forward.1}
  #allocation0 [shape = 'u32[]', space=smem, size = 0x4, offset = 0x4, fixed_abs, tag = 'smem constant byte address 0x4 - core index']
  #allocation1 [shape = 'u32[144,128]{1,0:T(1,128)}', space=vmem, size = 0x12000, scoped, tag = 'internal scratch']
  %s0 = inlined_call_operand.vmem [shape: f32[256,16], index: 0, kind: input, shape index: {}]
  %s1 = inlined_call_operand.vmem [shape: bf16[16,128], index: 1, kind: input, shape index: {}]
  %s2 = inlined_call_operand.vmem [shape: f32[1,128], index: 2, kind: input, shape index: {}]
  %s3 = inlined_call_operand.vmem [shape: bf16[128,128], index: 3, kind: input, shape index: {}]
  %s4 = inlined_call_operand.vmem [shape: f32[1,128], index: 4, kind: input, shape index: {}]
  %s5 = inlined_call_operand.vmem [shape: bf16[128,128], index: 5, kind: input, shape index: {}]
  %s6 = inlined_call_operand.vmem [shape: f32[1,128], index: 6, kind: input, shape index: {}]
  %s7 = inlined_call_operand.vmem [shape: f32[256,128], index: 7, kind: output, shape index: {}]
  %s8 = sld [smem:[#allocation0]]
  $region61: #{forward.1} parent=0
    _
  %s10 = ssub.s32 1, %s8
  %s11 = scalar_select 0, %s10, %s8
  loop: start=0, step=1, limit=4
  $region2: #{forward.1} parent=0 // loop_pre_header
    _
  $region3: #{forward.1} parent=0 // loop_header
    %s13 = sphi 0, %s17
    %p14 = scmp.ge.s32.totalorder %s13, 4
    %s23 = sphi 0, %s25
    %s26 = sphi 0, %s23
    %s27 = sphi 0, %s26
    %s43 = sphi 0, %s27
    %s47 = sphi 0, %s47
    %s49 = sphi 0, %s47
    %s50 = sphi 0, %s49
    %s64 = sphi 0, %s50
    %s68 = sphi 0, %s68
    %s70 = sphi 0, %s68
    %s71 = sphi 0, %s70
    %s85 = sphi 0, %s71
    %s89 = sphi 0, %s89
    %s91 = sphi 0, %s89
    %s92 = sphi 0, %s91
    %s106 = sphi 0, %s92
    %s110 = sphi 0, %s110
    %s112 = sphi 0, %s110
    %s113 = sphi 0, %s112
    %s127 = sphi 0, %s113
    %s131 = sphi 0, %s131
    %s133 = sphi 0, %s131
    %s134 = sphi 0, %s133
    %s148 = sphi 0, %s134
    %s152 = sphi 0, %s152
    %s154 = sphi 0, %s152
    %s155 = sphi 0, %s154
    %s169 = sphi 0, %s155
    %s175 = sphi 0, %s177
    %s178 = sphi 0, %s175
    %s179 = sphi 0, %s178
    %s195 = sphi 0, %s179
  $region4: #{forward.1} parent=0 // loop_header_branch
    %16 = sbr.rel (%p14) target = $region8
  $region5: #{forward.1} parent=0 // loop_body
    %s18 = ssub.s32 %s13, 1
    %s19 = ssub.s32 %s13, 2
    %s20 = sadd.s32 %s13, 1
    %s21 = ssub.s32 %s13, %s20
    %p22 = scmp.eq.s32.totalorder %s21, 0
    %s24 = sadd.s32 %s23, 1
    %s25 = scalar_select %p22, %s23, %s24
    %p28 = pneg %p22
    %p29 = scmp.eq.s32.totalorder %s13, 1
    %p30 = por %p28, %p29
    %p31 = scmp.ne.s32.totalorder %s23, %s26
    %p32 = scmp.eq.s32.totalorder %s13, 0
    %p33 = por %p31, %p32
    %p34 = scmp.ne.s32.totalorder %s23, %s26
    %p35 = scmp.eq.s32.totalorder %s18, 1
    %p36 = por %p34, %p35
    %p37 = scmp.ne.s32.totalorder %s26, %s27
    %p38 = scmp.eq.s32.totalorder %s18, 0
    %p39 = por %p37, %p38
    %p40 = scmp.ne.s32.totalorder %s26, %s27
    %p41 = scmp.eq.s32.totalorder %s19, 1
    %p42 = por %p40, %p41
    %p44 = scmp.ne.s32.totalorder %s27, %s43
    %p45 = scmp.eq.s32.totalorder %s19, 0
    %p46 = por %p44, %p45
    %s48 = sadd.s32 %s47, 1
    %p51 = scmp.eq.s32.totalorder %s13, 1
    %p52 = scmp.ne.s32.totalorder %s47, %s49
    %p53 = scmp.eq.s32.totalorder %s13, 0
    %p54 = por %p52, %p53
    %p55 = scmp.ne.s32.totalorder %s47, %s49
    %p56 = scmp.eq.s32.totalorder %s18, 1
    %p57 = por %p55, %p56
    %p58 = scmp.ne.s32.totalorder %s49, %s50
    %p59 = scmp.eq.s32.totalorder %s18, 0
    %p60 = por %p58, %p59
    %p61 = scmp.ne.s32.totalorder %s49, %s50
    %p62 = scmp.eq.s32.totalorder %s19, 1
    %p63 = por %p61, %p62
    %p65 = scmp.ne.s32.totalorder %s50, %s64
    %p66 = scmp.eq.s32.totalorder %s19, 0
    %p67 = por %p65, %p66
    %s69 = sadd.s32 %s68, 1
    %p72 = scmp.eq.s32.totalorder %s13, 1
    %p73 = scmp.ne.s32.totalorder %s68, %s70
    %p74 = scmp.eq.s32.totalorder %s13, 0
    %p75 = por %p73, %p74
    %p76 = scmp.ne.s32.totalorder %s68, %s70
    %p77 = scmp.eq.s32.totalorder %s18, 1
    %p78 = por %p76, %p77
    %p79 = scmp.ne.s32.totalorder %s70, %s71
    %p80 = scmp.eq.s32.totalorder %s18, 0
    %p81 = por %p79, %p80
    %p82 = scmp.ne.s32.totalorder %s70, %s71
    %p83 = scmp.eq.s32.totalorder %s19, 1
    %p84 = por %p82, %p83
    %p86 = scmp.ne.s32.totalorder %s71, %s85
    %p87 = scmp.eq.s32.totalorder %s19, 0
    %p88 = por %p86, %p87
    %s90 = sadd.s32 %s89, 1
    %p93 = scmp.eq.s32.totalorder %s13, 1
    %p94 = scmp.ne.s32.totalorder %s89, %s91
    %p95 = scmp.eq.s32.totalorder %s13, 0
    %p96 = por %p94, %p95
    %p97 = scmp.ne.s32.totalorder %s89, %s91
    %p98 = scmp.eq.s32.totalorder %s18, 1
    %p99 = por %p97, %p98
    %p100 = scmp.ne.s32.totalorder %s91, %s92
    %p101 = scmp.eq.s32.totalorder %s18, 0
    %p102 = por %p100, %p101
    %p103 = scmp.ne.s32.totalorder %s91, %s92
    %p104 = scmp.eq.s32.totalorder %s19, 1
    %p105 = por %p103, %p104
    %p107 = scmp.ne.s32.totalorder %s92, %s106
    %p108 = scmp.eq.s32.totalorder %s19, 0
    %p109 = por %p107, %p108
    %s111 = sadd.s32 %s110, 1
    %p114 = scmp.eq.s32.totalorder %s13, 1
    %p115 = scmp.ne.s32.totalorder %s110, %s112
    %p116 = scmp.eq.s32.totalorder %s13, 0
    %p117 = por %p115, %p116
    %p118 = scmp.ne.s32.totalorder %s110, %s112
    %p119 = scmp.eq.s32.totalorder %s18, 1
    %p120 = por %p118, %p119
    %p121 = scmp.ne.s32.totalorder %s112, %s113
    %p122 = scmp.eq.s32.totalorder %s18, 0
    %p123 = por %p121, %p122
    %p124 = scmp.ne.s32.totalorder %s112, %s113
    %p125 = scmp.eq.s32.totalorder %s19, 1
    %p126 = por %p124, %p125
    %p128 = scmp.ne.s32.totalorder %s113, %s127
    %p129 = scmp.eq.s32.totalorder %s19, 0
    %p130 = por %p128, %p129
    %s132 = sadd.s32 %s131, 1
    %p135 = scmp.eq.s32.totalorder %s13, 1
    %p136 = scmp.ne.s32.totalorder %s131, %s133
    %p137 = scmp.eq.s32.totalorder %s13, 0
    %p138 = por %p136, %p137
    %p139 = scmp.ne.s32.totalorder %s131, %s133
    %p140 = scmp.eq.s32.totalorder %s18, 1
    %p141 = por %p139, %p140
    %p142 = scmp.ne.s32.totalorder %s133, %s134
    %p143 = scmp.eq.s32.totalorder %s18, 0
    %p144 = por %p142, %p143
    %p145 = scmp.ne.s32.totalorder %s133, %s134
    %p146 = scmp.eq.s32.totalorder %s19, 1
    %p147 = por %p145, %p146
    %p149 = scmp.ne.s32.totalorder %s134, %s148
    %p150 = scmp.eq.s32.totalorder %s19, 0
    %p151 = por %p149, %p150
    %s153 = sadd.s32 %s152, 1
    %p156 = scmp.eq.s32.totalorder %s13, 1
    %p157 = scmp.ne.s32.totalorder %s152, %s154
    %p158 = scmp.eq.s32.totalorder %s13, 0
    %p159 = por %p157, %p158
    %p160 = scmp.ne.s32.totalorder %s152, %s154
    %p161 = scmp.eq.s32.totalorder %s18, 1
    %p162 = por %p160, %p161
    %p163 = scmp.ne.s32.totalorder %s154, %s155
    %p164 = scmp.eq.s32.totalorder %s18, 0
    %p165 = por %p163, %p164
    %p166 = scmp.ne.s32.totalorder %s154, %s155
    %p167 = scmp.eq.s32.totalorder %s19, 1
    %p168 = por %p166, %p167
    %p170 = scmp.ne.s32.totalorder %s155, %s169
    %p171 = scmp.eq.s32.totalorder %s19, 0
    %p172 = por %p170, %p171
    %s173 = ssub.s32 %s13, %s20
    %p174 = scmp.eq.s32.totalorder %s173, 0
    %s176 = sadd.s32 %s175, 1
    %s177 = scalar_select %p174, %s175, %s176
    %p180 = pneg %p174
    %p181 = scmp.eq.s32.totalorder %s13, 1
    %p182 = por %p180, %p181
    %p183 = scmp.ne.s32.totalorder %s175, %s178
    %p184 = scmp.eq.s32.totalorder %s13, 0
    %p185 = por %p183, %p184
    %p186 = scmp.ne.s32.totalorder %s175, %s178
    %p187 = scmp.eq.s32.totalorder %s18, 1
    %p188 = por %p186, %p187
    %p189 = scmp.ne.s32.totalorder %s178, %s179
    %p190 = scmp.eq.s32.totalorder %s18, 0
    %p191 = por %p189, %p190
    %p192 = scmp.ne.s32.totalorder %s178, %s179
    %p193 = scmp.eq.s32.totalorder %s19, 1
    %p194 = por %p192, %p193
    %p196 = scmp.ne.s32.totalorder %s179, %s195
    %p197 = scmp.eq.s32.totalorder %s19, 0
    %p198 = por %p196, %p197
    %p199 = scmp.le.s32.totalorder 1, %s13
    %p200 = scmp.lt.s32.totalorder %s13, 3
    %p201 = pnand %p199, %p200
    %p202 = pneg %p201
    // Predicated region
    $region9: #{forward.1} parent=5 // pred_check
      _
    $region10: #{forward.1} parent=5 // pred_check_branch
      %204 = sbr.rel (%p201) target = $region12
    $region11: #{forward.1} parent=5 // pred_region
      %s205 = ssub.s32 %s13, 1
      // Predicated region
      $region13: #{forward.1} parent=11 // pred_check
        %p206 = pneg %p60
      $region14: #{forward.1} parent=11 // pred_check_branch
        %208 = sbr.rel (%p206) target = $region16
      $region15: #{forward.1} parent=11 // pred_region
        _
      $region16: #{forward.1} parent=11 // pred_fallthru
        _
      // Predicated region
      $region17: #{forward.1} parent=11 // pred_check
        %p209 = pneg %p81
      $region18: #{forward.1} parent=11 // pred_check_branch
        %211 = sbr.rel (%p209) target = $region20
      $region19: #{forward.1} parent=11 // pred_region
        _
      $region20: #{forward.1} parent=11 // pred_fallthru
        _
      // Predicated region
      $region21: #{forward.1} parent=11 // pred_check
        %p212 = pneg %p102
      $region22: #{forward.1} parent=11 // pred_check_branch
        %214 = sbr.rel (%p212) target = $region24
      $region23: #{forward.1} parent=11 // pred_region
        _
      $region24: #{forward.1} parent=11 // pred_fallthru
        _
      // Predicated region
      $region25: #{forward.1} parent=11 // pred_check
        %p215 = pneg %p123
      $region26: #{forward.1} parent=11 // pred_check_branch
        %217 = sbr.rel (%p215) target = $region28
      $region27: #{forward.1} parent=11 // pred_region
        _
      $region28: #{forward.1} parent=11 // pred_fallthru
        _
      // Predicated region
      $region29: #{forward.1} parent=11 // pred_check
        %p218 = pneg %p144
      $region30: #{forward.1} parent=11 // pred_check_branch
        %220 = sbr.rel (%p218) target = $region32
      $region31: #{forward.1} parent=11 // pred_region
        _
      $region32: #{forward.1} parent=11 // pred_fallthru
        _
      // Predicated region
      $region33: #{forward.1} parent=11 // pred_check
        %p221 = pneg %p165
      $region34: #{forward.1} parent=11 // pred_check_branch
        %223 = sbr.rel (%p221) target = $region36
      $region35: #{forward.1} parent=11 // pred_region
        _
      $region36: #{forward.1} parent=11 // pred_fallthru
        _
    $region12: #{forward.1} parent=5 // pred_fallthru
      _
    %p224 = scmp.lt.s32.totalorder %s13, 2
    // Predicated region
    $region37: #{forward.1} parent=5 // pred_check
      %p225 = pneg %p224
    $region38: #{forward.1} parent=5 // pred_check_branch
      %227 = sbr.rel (%p225) target = $region40
    $region39: #{forward.1} parent=5 // pred_region
      // Predicated region
      $region41: #{forward.1} parent=39 // pred_check
        %p228 = pneg %p33
      $region42: #{forward.1} parent=39 // pred_check_branch
        %230 = sbr.rel (%p228) target = $region44
      $region43: #{forward.1} parent=39 // pred_region
        %s231 = smul.u32 16, %s13
        %p232 = scmp.lt.s32.totalorder %s231, 31
        %s233 = scalar_select %p232, %s231, 31
        %s234 = smul.addr %s233, 8
        %s235 = scalar_lea.vmem %s0, %s234
        %s236 = smul.u32 16, %s13
      $region44: #{forward.1} parent=39 // pred_fallthru
        _
    $region40: #{forward.1} parent=5 // pred_fallthru
      _
    %p237 = scmp.le.s32.totalorder 1, %s13
    %p238 = scmp.lt.s32.totalorder %s13, 3
    %p239 = pnand %p237, %p238
    %p240 = pneg %p239
    // Predicated region
    $region45: #{forward.1} parent=5 // pred_check
      _
    $region46: #{forward.1} parent=5 // pred_check_branch
      %242 = sbr.rel (%p239) target = $region48
    $region47: #{forward.1} parent=5 // pred_region
      %s243 = ssub.s32 %s13, 1
      %s244 = smul.u32 16, %s18
      %p245 = scmp.lt.s32.totalorder %s244, 31
      %s246 = scalar_select %p245, %s244, 31
      %s247 = smul.addr %s246, 8
      %s248 = scalar_lea.vmem %s0, %s247
      %p249 = pneg %p39
      %p250 = pneg %p36
      %p251 = pneg %p60
      %p252 = pneg %p57
      %p253 = pneg %p81
      %p254 = pneg %p78
      %p255 = pneg %p102
      %p256 = pneg %p99
      %p257 = pneg %p123
      %p258 = pneg %p120
      %p259 = pneg %p144
      %p260 = pneg %p141
      %p261 = pneg %p165
      %p262 = pneg %p162
      %p263 = pneg %p191
      %p264 = pneg %p188
      %s265 = smul.u32 16, %s18
      %p266 = scmp.lt.s32.totalorder %s265, 31
      %s267 = scalar_select %p266, %s265, 31
      %s268 = smul.addr %s267, 8
      %s269 = scalar_lea.vmem %s7, %s268
      %s270 = smul.u32 16, %s18
      %p271 = scmp.lt.s32.totalorder %s270, 31
      %s272 = scalar_select %p271, %s270, 31
      %s273 = smul.addr %s272, 8
      %s274 = scalar_lea.vmem %s0, %s273
      %s275 = smul.u32 16, %s18
      %s276 = smul.u32 16, %s18
      %p277 = scmp.lt.s32.totalorder %s276, 31
      %s278 = scalar_select %p277, %s276, 31
      %s279 = smul.addr %s278, 8
      %s280 = scalar_lea.vmem %s7, %s279
      %s281 = smul.u32 16, %s18
      %v283 = vld [vmem:[%s274] sm:$0xff]
      %v284 = vld [vmem:[%s274 + $0x8] sm:$0xff]
      %v285 = vld [vmem:[%s274 + $0x10] sm:$0xff]
      %v286 = vld [vmem:[%s274 + $0x18] sm:$0xff]
      %v287 = vld [vmem:[%s274 + $0x20] sm:$0xff]
      %v288 = vld [vmem:[%s274 + $0x28] sm:$0xff]
      %v289 = vld [vmem:[%s274 + $0x30] sm:$0xff]
      %v290 = vld [vmem:[%s274 + $0x38] sm:$0xff]
      %v291 = vld [vmem:[%s274 + $0x40] sm:$0xff]
      %v292 = vld [vmem:[%s274 + $0x48] sm:$0xff]
      %v293 = vld [vmem:[%s274 + $0x50] sm:$0xff]
      %v294 = vld [vmem:[%s274 + $0x58] sm:$0xff]
      %v295 = vld [vmem:[%s274 + $0x60] sm:$0xff]
      %v296 = vld [vmem:[%s274 + $0x68] sm:$0xff]
      %v297 = vld [vmem:[%s274 + $0x70] sm:$0xff]
      %v298 = vld [vmem:[%s274 + $0x78] sm:$0xff]
      %v299 = vpack.c.bf16 %v284, %v283
      %v300 = vpack.c.bf16 %v286, %v285
      %v301 = vpack.c.bf16 %v288, %v287
      %v302 = vpack.c.bf16 %v290, %v289
      %v303 = vpack.c.bf16 %v292, %v291
      %v304 = vpack.c.bf16 %v294, %v293
      %v305 = vpack.c.bf16 %v296, %v295
      %v306 = vpack.c.bf16 %v298, %v297
      %v307 = vld [vmem:[%s1] sm:$0xf]
      %v308 = vld [vmem:[%s1 + $0x4] sm:$0xf]
      %v309 = vld [vmem:[%s2] sm:$0x1]
      %v311 = vlaneseq
      %v312 = vshrl.u32 %v311, 7
      %v313 = vsub.s32 0, %v312
      %v314 = vrot.slane %v309, %v313
      %v318 = vunpack.c.l.b16 %v307
      %v319 = vunpack.c.l.b16 %v308
      %v320 = vpack.c.b16 %v319, %v318
      %vm322 = vcmask 130048
      %v324 = vsel %vm322, %v299, 0
      %v327 = vsel %vm322, %v300, 0
      %v330 = vsel %vm322, %v301, 0
      %v333 = vsel %vm322, %v302, 0
      %v336 = vsel %vm322, %v303, 0
      %v339 = vsel %vm322, %v304, 0
      %v342 = vsel %vm322, %v305, 0
      %v345 = vsel %vm322, %v306, 0
      %347 = vmatprep.subr.bf16.mxu0 0
      %348 = vmatpush1.bf16.msra.mxu0 0
      %349 = vmatprep.subr.bf16.mxu0 0
      %350 = vmatpush1.bf16.msra.mxu0 0
      %351 = vmatprep.subr.bf16.mxu0 0
      %352 = vmatpush1.bf16.msra.mxu0 0
      %353 = vmatprep.subr.bf16.mxu0 0
      %354 = vmatpush1.bf16.msra.mxu0 0
      %355 = vmatprep.subr.bf16.mxu0 0
      %356 = vmatpush1.bf16.msra.mxu0 0
      %357 = vmatprep.subr.bf16.mxu0 0
      %358 = vmatpush1.bf16.msra.mxu0 0
      %359 = vmatprep.subr.bf16.mxu0 0
      %360 = vmatpush1.bf16.msra.mxu0 0
      %361 = vmatprep.subr.bf16.mxu0 0
      %362 = vmatpush1.bf16.msra.mxu0 %v320
      %363 = vmatprep.subr.bf16.mxu0 0
      %364 = vmatpush2.bf16.msra.mxu0 0
      %365 = vmatprep.subr.bf16.mxu0 0
      %366 = vmatpush2.bf16.msra.mxu0 0
      %367 = vmatprep.subr.bf16.mxu0 0
      %368 = vmatpush2.bf16.msra.mxu0 0
      %369 = vmatprep.subr.bf16.mxu0 0
      %370 = vmatpush2.bf16.msra.mxu0 0
      %371 = vmatprep.subr.bf16.mxu0 0
      %372 = vmatpush2.bf16.msra.mxu0 0
      %373 = vmatprep.subr.bf16.mxu0 0
      %374 = vmatpush2.bf16.msra.mxu0 0
      %375 = vmatprep.subr.bf16.mxu0 0
      %376 = vmatpush2.bf16.msra.mxu0 0
      %377 = vmatprep.subr.bf16.mxu0 0
      %378 = vmatpush2.bf16.msra.mxu0 0
      %379 = vmatprep.mubr.bf16.mxu0 0
      %380 = vmatmul.mubr.bf16.gmra.mxu0 %v324
      %v381 = vpop.f32.mrf.mxu0
      %v382 = vadd.f32 %v314, %v381
      %v383 = vpop.f32.mrf.mxu0
      %v384 = vpop.f32.mrf.mxu0
      %v385 = vadd.f32 %v314, %v384
      %v386 = vpop.f32.mrf.mxu0
      %387 = vmatprep.mubr.bf16.mxu0 0
      %388 = vmatmul.mubr.bf16.gmra.mxu0 %v327
      %v389 = vpop.f32.mrf.mxu0
      %v390 = vadd.f32 %v314, %v389
      %v391 = vpop.f32.mrf.mxu0
      %v392 = vpop.f32.mrf.mxu0
      %v393 = vadd.f32 %v314, %v392
      %v394 = vpop.f32.mrf.mxu0
      %395 = vmatprep.mubr.bf16.mxu0 0
      %396 = vmatmul.mubr.bf16.gmra.mxu0 %v330
      %v397 = vpop.f32.mrf.mxu0
      %v398 = vadd.f32 %v314, %v397
      %v399 = vpop.f32.mrf.mxu0
      %v400 = vpop.f32.mrf.mxu0
      %v401 = vadd.f32 %v314, %v400
      %v402 = vpop.f32.mrf.mxu0
      %403 = vmatprep.mubr.bf16.mxu0 0
      %404 = vmatmul.mubr.bf16.gmra.mxu0 %v333
      %v405 = vpop.f32.mrf.mxu0
      %v406 = vadd.f32 %v314, %v405
      %v407 = vpop.f32.mrf.mxu0
      %v408 = vpop.f32.mrf.mxu0
      %v409 = vadd.f32 %v314, %v408
      %v410 = vpop.f32.mrf.mxu0
      %411 = vmatprep.mubr.bf16.mxu0 0
      %412 = vmatmul.mubr.bf16.gmra.mxu0 %v336
      %v413 = vpop.f32.mrf.mxu0
      %v414 = vadd.f32 %v314, %v413
      %v415 = vpop.f32.mrf.mxu0
      %v416 = vpop.f32.mrf.mxu0
      %v417 = vadd.f32 %v314, %v416
      %v418 = vpop.f32.mrf.mxu0
      %419 = vmatprep.mubr.bf16.mxu0 0
      %420 = vmatmul.mubr.bf16.gmra.mxu0 %v339
      %v421 = vpop.f32.mrf.mxu0
      %v422 = vadd.f32 %v314, %v421
      %v423 = vpop.f32.mrf.mxu0
      %v424 = vpop.f32.mrf.mxu0
      %v425 = vadd.f32 %v314, %v424
      %v426 = vpop.f32.mrf.mxu0
      %427 = vmatprep.mubr.bf16.mxu0 0
      %428 = vmatmul.mubr.bf16.gmra.mxu0 %v342
      %v429 = vpop.f32.mrf.mxu0
      %v430 = vadd.f32 %v314, %v429
      %v431 = vpop.f32.mrf.mxu0
      %v432 = vpop.f32.mrf.mxu0
      %v433 = vadd.f32 %v314, %v432
      %v434 = vpop.f32.mrf.mxu0
      %435 = vmatprep.mubr.bf16.mxu0 0
      %436 = vmatmul.mubr.bf16.gmra.mxu0 %v345
      %v437 = vpop.f32.mrf.mxu0
      %v438 = vadd.f32 %v314, %v437
      %v439 = vpop.f32.mrf.mxu0
      %v440 = vpop.f32.mrf.mxu0
      %v441 = vadd.f32 %v314, %v440
      %v442 = vpop.f32.mrf.mxu0
      %443 = vdwg.mxu0
      %v444 = vmax.f32 %v382, 0.0
      %v445 = vmax.f32 %v385, 0.0
      %v446 = vmax.f32 %v390, 0.0
      %v447 = vmax.f32 %v393, 0.0
      %v448 = vmax.f32 %v398, 0.0
      %v449 = vmax.f32 %v401, 0.0
      %v450 = vmax.f32 %v406, 0.0
      %v451 = vmax.f32 %v409, 0.0
      %v452 = vmax.f32 %v414, 0.0
      %v453 = vmax.f32 %v417, 0.0
      %v454 = vmax.f32 %v422, 0.0
      %v455 = vmax.f32 %v425, 0.0
      %v456 = vmax.f32 %v430, 0.0
      %v457 = vmax.f32 %v433, 0.0
      %v458 = vmax.f32 %v438, 0.0
      %v459 = vmax.f32 %v441, 0.0
      %v460 = vpack.c.bf16 %v445, %v444
      %v461 = vpack.c.bf16 %v447, %v446
      %v462 = vpack.c.bf16 %v449, %v448
      %v463 = vpack.c.bf16 %v451, %v450
      %v464 = vpack.c.bf16 %v453, %v452
      %v465 = vpack.c.bf16 %v455, %v454
      %v466 = vpack.c.bf16 %v457, %v456
      %v467 = vpack.c.bf16 %v459, %v458
      %v468 = vld [vmem:[%s3] sm:$0xf]
      %v469 = vld [vmem:[%s3 + $0x4] sm:$0xf]
      %v470 = vld [vmem:[%s3 + $0x8] sm:$0xf]
      %v471 = vld [vmem:[%s3 + $0xc] sm:$0xf]
      %v472 = vld [vmem:[%s3 + $0x10] sm:$0xf]
      %v473 = vld [vmem:[%s3 + $0x14] sm:$0xf]
      %v474 = vld [vmem:[%s3 + $0x18] sm:$0xf]
      %v475 = vld [vmem:[%s3 + $0x1c] sm:$0xf]
      %v476 = vld [vmem:[%s3 + $0x20] sm:$0xf]
      %v477 = vld [vmem:[%s3 + $0x24] sm:$0xf]
      %v478 = vld [vmem:[%s3 + $0x28] sm:$0xf]
      %v479 = vld [vmem:[%s3 + $0x2c] sm:$0xf]
      %v480 = vld [vmem:[%s3 + $0x30] sm:$0xf]
      %v481 = vld [vmem:[%s3 + $0x34] sm:$0xf]
      %v482 = vld [vmem:[%s3 + $0x38] sm:$0xf]
      %v483 = vld [vmem:[%s3 + $0x3c] sm:$0xf]
      %v484 = vld [vmem:[%s4] sm:$0x1]
      %v486 = vlaneseq
      %v487 = vshrl.u32 %v486, 7
      %v488 = vsub.s32 0, %v487
      %v489 = vrot.slane %v484, %v488
      %v507 = vunpack.c.l.b16 %v468
      %v508 = vunpack.c.l.b16 %v469
      %v509 = vunpack.c.l.b16 %v470
      %v510 = vunpack.c.l.b16 %v471
      %v511 = vunpack.c.l.b16 %v472
      %v512 = vunpack.c.l.b16 %v473
      %v513 = vunpack.c.l.b16 %v474
      %v514 = vunpack.c.l.b16 %v475
      %v515 = vunpack.c.l.b16 %v476
      %v516 = vunpack.c.l.b16 %v477
      %v517 = vunpack.c.l.b16 %v478
      %v518 = vunpack.c.l.b16 %v479
      %v519 = vunpack.c.l.b16 %v480
      %v520 = vunpack.c.l.b16 %v481
      %v521 = vunpack.c.l.b16 %v482
      %v522 = vunpack.c.l.b16 %v483
      %v523 = vpack.c.b16 %v508, %v507
      %v524 = vpack.c.b16 %v510, %v509
      %v525 = vpack.c.b16 %v512, %v511
      %v526 = vpack.c.b16 %v514, %v513
      %v527 = vpack.c.b16 %v516, %v515
      %v528 = vpack.c.b16 %v518, %v517
      %v529 = vpack.c.b16 %v520, %v519
      %v530 = vpack.c.b16 %v522, %v521
      %539 = vmatprep.subr.bf16.mxu0 0
      %540 = vmatpush1.bf16.msra.mxu0 %v530
      %541 = vmatprep.subr.bf16.mxu0 0
      %542 = vmatpush1.bf16.msra.mxu0 %v529
      %543 = vmatprep.subr.bf16.mxu0 0
      %544 = vmatpush1.bf16.msra.mxu0 %v528
      %545 = vmatprep.subr.bf16.mxu0 0
      %546 = vmatpush1.bf16.msra.mxu0 %v527
      %547 = vmatprep.subr.bf16.mxu0 0
      %548 = vmatpush1.bf16.msra.mxu0 %v526
      %549 = vmatprep.subr.bf16.mxu0 0
      %550 = vmatpush1.bf16.msra.mxu0 %v525
      %551 = vmatprep.subr.bf16.mxu0 0
      %552 = vmatpush1.bf16.msra.mxu0 %v524
      %553 = vmatprep.subr.bf16.mxu0 0
      %554 = vmatpush1.bf16.msra.mxu0 %v523
      %555 = vmatprep.subr.bf16.mxu0 0
      %556 = vmatpush2.bf16.msra.mxu0 0
      %557 = vmatprep.subr.bf16.mxu0 0
      %558 = vmatpush2.bf16.msra.mxu0 0
      %559 = vmatprep.subr.bf16.mxu0 0
      %560 = vmatpush2.bf16.msra.mxu0 0
      %561 = vmatprep.subr.bf16.mxu0 0
      %562 = vmatpush2.bf16.msra.mxu0 0
      %563 = vmatprep.subr.bf16.mxu0 0
      %564 = vmatpush2.bf16.msra.mxu0 0
      %565 = vmatprep.subr.bf16.mxu0 0
      %566 = vmatpush2.bf16.msra.mxu0 0
      %567 = vmatprep.subr.bf16.mxu0 0
      %568 = vmatpush2.bf16.msra.mxu0 0
      %569 = vmatprep.subr.bf16.mxu0 0
      %570 = vmatpush2.bf16.msra.mxu0 0
      %571 = vmatprep.mubr.bf16.mxu0 0
      %572 = vmatmul.mubr.bf16.gmra.mxu0 %v460
      %v573 = vpop.f32.mrf.mxu0
      %v574 = vadd.f32 %v489, %v573
      %v575 = vpop.f32.mrf.mxu0
      %v576 = vpop.f32.mrf.mxu0
      %v577 = vadd.f32 %v489, %v576
      %v578 = vpop.f32.mrf.mxu0
      %579 = vmatprep.mubr.bf16.mxu0 0
      %580 = vmatmul.mubr.bf16.gmra.mxu0 %v461
      %v581 = vpop.f32.mrf.mxu0
      %v582 = vadd.f32 %v489, %v581
      %v583 = vpop.f32.mrf.mxu0
      %v584 = vpop.f32.mrf.mxu0
      %v585 = vadd.f32 %v489, %v584
      %v586 = vpop.f32.mrf.mxu0
      %587 = vmatprep.mubr.bf16.mxu0 0
      %588 = vmatmul.mubr.bf16.gmra.mxu0 %v462
      %v589 = vpop.f32.mrf.mxu0
      %v590 = vadd.f32 %v489, %v589
      %v591 = vpop.f32.mrf.mxu0
      %v592 = vpop.f32.mrf.mxu0
      %v593 = vadd.f32 %v489, %v592
      %v594 = vpop.f32.mrf.mxu0
      %595 = vmatprep.mubr.bf16.mxu0 0
      %596 = vmatmul.mubr.bf16.gmra.mxu0 %v463
      %v597 = vpop.f32.mrf.mxu0
      %v598 = vadd.f32 %v489, %v597
      %v599 = vpop.f32.mrf.mxu0
      %v600 = vpop.f32.mrf.mxu0
      %v601 = vadd.f32 %v489, %v600
      %v602 = vpop.f32.mrf.mxu0
      %603 = vmatprep.mubr.bf16.mxu0 0
      %604 = vmatmul.mubr.bf16.gmra.mxu0 %v464
      %v605 = vpop.f32.mrf.mxu0
      %v606 = vadd.f32 %v489, %v605
      %v607 = vpop.f32.mrf.mxu0
      %v608 = vpop.f32.mrf.mxu0
      %v609 = vadd.f32 %v489, %v608
      %v610 = vpop.f32.mrf.mxu0
      %611 = vmatprep.mubr.bf16.mxu0 0
      %612 = vmatmul.mubr.bf16.gmra.mxu0 %v465
      %v613 = vpop.f32.mrf.mxu0
      %v614 = vadd.f32 %v489, %v613
      %v615 = vpop.f32.mrf.mxu0
      %v616 = vpop.f32.mrf.mxu0
      %v617 = vadd.f32 %v489, %v616
      %v618 = vpop.f32.mrf.mxu0
      %619 = vmatprep.mubr.bf16.mxu0 0
      %620 = vmatmul.mubr.bf16.gmra.mxu0 %v466
      %v621 = vpop.f32.mrf.mxu0
      %v622 = vadd.f32 %v489, %v621
      %v623 = vpop.f32.mrf.mxu0
      %v624 = vpop.f32.mrf.mxu0
      %v625 = vadd.f32 %v489, %v624
      %v626 = vpop.f32.mrf.mxu0
      %627 = vmatprep.mubr.bf16.mxu0 0
      %628 = vmatmul.mubr.bf16.gmra.mxu0 %v467
      %v629 = vpop.f32.mrf.mxu0
      %v630 = vadd.f32 %v489, %v629
      %v631 = vpop.f32.mrf.mxu0
      %v632 = vpop.f32.mrf.mxu0
      %v633 = vadd.f32 %v489, %v632
      %v634 = vpop.f32.mrf.mxu0
      %635 = vdwg.mxu0
      %v636 = vmax.f32 %v574, 0.0
      %v637 = vmax.f32 %v577, 0.0
      %v638 = vmax.f32 %v582, 0.0
      %v639 = vmax.f32 %v585, 0.0
      %v640 = vmax.f32 %v590, 0.0
      %v641 = vmax.f32 %v593, 0.0
      %v642 = vmax.f32 %v598, 0.0
      %v643 = vmax.f32 %v601, 0.0
      %v644 = vmax.f32 %v606, 0.0
      %v645 = vmax.f32 %v609, 0.0
      %v646 = vmax.f32 %v614, 0.0
      %v647 = vmax.f32 %v617, 0.0
      %v648 = vmax.f32 %v622, 0.0
      %v649 = vmax.f32 %v625, 0.0
      %v650 = vmax.f32 %v630, 0.0
      %v651 = vmax.f32 %v633, 0.0
      %v652 = vpack.c.bf16 %v637, %v636
      %v653 = vpack.c.bf16 %v639, %v638
      %v654 = vpack.c.bf16 %v641, %v640
      %v655 = vpack.c.bf16 %v643, %v642
      %v656 = vpack.c.bf16 %v645, %v644
      %v657 = vpack.c.bf16 %v647, %v646
      %v658 = vpack.c.bf16 %v649, %v648
      %v659 = vpack.c.bf16 %v651, %v650
      %v660 = vld [vmem:[%s5] sm:$0xf]
      %v661 = vld [vmem:[%s5 + $0x4] sm:$0xf]
      %v662 = vld [vmem:[%s5 + $0x8] sm:$0xf]
      %v663 = vld [vmem:[%s5 + $0xc] sm:$0xf]
      %v664 = vld [vmem:[%s5 + $0x10] sm:$0xf]
      %v665 = vld [vmem:[%s5 + $0x14] sm:$0xf]
      %v666 = vld [vmem:[%s5 + $0x18] sm:$0xf]
      %v667 = vld [vmem:[%s5 + $0x1c] sm:$0xf]
      %v668 = vld [vmem:[%s5 + $0x20] sm:$0xf]
      %v669 = vld [vmem:[%s5 + $0x24] sm:$0xf]
      %v670 = vld [vmem:[%s5 + $0x28] sm:$0xf]
      %v671 = vld [vmem:[%s5 + $0x2c] sm:$0xf]
      %v672 = vld [vmem:[%s5 + $0x30] sm:$0xf]
      %v673 = vld [vmem:[%s5 + $0x34] sm:$0xf]
      %v674 = vld [vmem:[%s5 + $0x38] sm:$0xf]
      %v675 = vld [vmem:[%s5 + $0x3c] sm:$0xf]
      %v676 = vld [vmem:[%s6] sm:$0x1]
      %v678 = vlaneseq
      %v679 = vshrl.u32 %v678, 7
      %v680 = vsub.s32 0, %v679
      %v681 = vrot.slane %v676, %v680
      %v699 = vunpack.c.l.b16 %v660
      %v700 = vunpack.c.l.b16 %v661
      %v701 = vunpack.c.l.b16 %v662
      %v702 = vunpack.c.l.b16 %v663
      %v703 = vunpack.c.l.b16 %v664
      %v704 = vunpack.c.l.b16 %v665
      %v705 = vunpack.c.l.b16 %v666
      %v706 = vunpack.c.l.b16 %v667
      %v707 = vunpack.c.l.b16 %v668
      %v708 = vunpack.c.l.b16 %v669
      %v709 = vunpack.c.l.b16 %v670
      %v710 = vunpack.c.l.b16 %v671
      %v711 = vunpack.c.l.b16 %v672
      %v712 = vunpack.c.l.b16 %v673
      %v713 = vunpack.c.l.b16 %v674
      %v714 = vunpack.c.l.b16 %v675
      %v715 = vpack.c.b16 %v700, %v699
      %v716 = vpack.c.b16 %v702, %v701
      %v717 = vpack.c.b16 %v704, %v703
      %v718 = vpack.c.b16 %v706, %v705
      %v719 = vpack.c.b16 %v708, %v707
      %v720 = vpack.c.b16 %v710, %v709
      %v721 = vpack.c.b16 %v712, %v711
      %v722 = vpack.c.b16 %v714, %v713
      %731 = vmatprep.subr.bf16.mxu0 0
      %732 = vmatpush1.bf16.msra.mxu0 %v722
      %733 = vmatprep.subr.bf16.mxu0 0
      %734 = vmatpush1.bf16.msra.mxu0 %v721
      %735 = vmatprep.subr.bf16.mxu0 0
      %736 = vmatpush1.bf16.msra.mxu0 %v720
      %737 = vmatprep.subr.bf16.mxu0 0
      %738 = vmatpush1.bf16.msra.mxu0 %v719
      %739 = vmatprep.subr.bf16.mxu0 0
      %740 = vmatpush1.bf16.msra.mxu0 %v718
      %741 = vmatprep.subr.bf16.mxu0 0
      %742 = vmatpush1.bf16.msra.mxu0 %v717
      %743 = vmatprep.subr.bf16.mxu0 0
      %744 = vmatpush1.bf16.msra.mxu0 %v716
      %745 = vmatprep.subr.bf16.mxu0 0
      %746 = vmatpush1.bf16.msra.mxu0 %v715
      %747 = vmatprep.subr.bf16.mxu0 0
      %748 = vmatpush2.bf16.msra.mxu0 0
      %749 = vmatprep.subr.bf16.mxu0 0
      %750 = vmatpush2.bf16.msra.mxu0 0
      %751 = vmatprep.subr.bf16.mxu0 0
      %752 = vmatpush2.bf16.msra.mxu0 0
      %753 = vmatprep.subr.bf16.mxu0 0
      %754 = vmatpush2.bf16.msra.mxu0 0
      %755 = vmatprep.subr.bf16.mxu0 0
      %756 = vmatpush2.bf16.msra.mxu0 0
      %757 = vmatprep.subr.bf16.mxu0 0
      %758 = vmatpush2.bf16.msra.mxu0 0
      %759 = vmatprep.subr.bf16.mxu0 0
      %760 = vmatpush2.bf16.msra.mxu0 0
      %761 = vmatprep.subr.bf16.mxu0 0
      %762 = vmatpush2.bf16.msra.mxu0 0
      %763 = vmatprep.mubr.bf16.mxu0 0
      %764 = vmatmul.mubr.bf16.gmra.mxu0 %v652
      %v765 = vpop.f32.mrf.mxu0
      %v766 = vadd.f32 %v681, %v765
      %v767 = vpop.f32.mrf.mxu0
      %v768 = vpop.f32.mrf.mxu0
      %v769 = vadd.f32 %v681, %v768
      %v770 = vpop.f32.mrf.mxu0
      %771 = vmatprep.mubr.bf16.mxu0 0
      %772 = vmatmul.mubr.bf16.gmra.mxu0 %v653
      %v773 = vpop.f32.mrf.mxu0
      %v774 = vadd.f32 %v681, %v773
      %v775 = vpop.f32.mrf.mxu0
      %v776 = vpop.f32.mrf.mxu0
      %v777 = vadd.f32 %v681, %v776
      %v778 = vpop.f32.mrf.mxu0
      %779 = vmatprep.mubr.bf16.mxu0 0
      %780 = vmatmul.mubr.bf16.gmra.mxu0 %v654
      %v781 = vpop.f32.mrf.mxu0
      %v782 = vadd.f32 %v681, %v781
      %v783 = vpop.f32.mrf.mxu0
      %v784 = vpop.f32.mrf.mxu0
      %v785 = vadd.f32 %v681, %v784
      %v786 = vpop.f32.mrf.mxu0
      %787 = vmatprep.mubr.bf16.mxu0 0
      %788 = vmatmul.mubr.bf16.gmra.mxu0 %v655
      %v789 = vpop.f32.mrf.mxu0
      %v790 = vadd.f32 %v681, %v789
      %v791 = vpop.f32.mrf.mxu0
      %v792 = vpop.f32.mrf.mxu0
      %v793 = vadd.f32 %v681, %v792
      %v794 = vpop.f32.mrf.mxu0
      %795 = vmatprep.mubr.bf16.mxu0 0
      %796 = vmatmul.mubr.bf16.gmra.mxu0 %v656
      %v797 = vpop.f32.mrf.mxu0
      %v798 = vadd.f32 %v681, %v797
      %v799 = vpop.f32.mrf.mxu0
      %v800 = vpop.f32.mrf.mxu0
      %v801 = vadd.f32 %v681, %v800
      %v802 = vpop.f32.mrf.mxu0
      %803 = vmatprep.mubr.bf16.mxu0 0
      %804 = vmatmul.mubr.bf16.gmra.mxu0 %v657
      %v805 = vpop.f32.mrf.mxu0
      %v806 = vadd.f32 %v681, %v805
      %v807 = vpop.f32.mrf.mxu0
      %v808 = vpop.f32.mrf.mxu0
      %v809 = vadd.f32 %v681, %v808
      %v810 = vpop.f32.mrf.mxu0
      %811 = vmatprep.mubr.bf16.mxu0 0
      %812 = vmatmul.mubr.bf16.gmra.mxu0 %v658
      %v813 = vpop.f32.mrf.mxu0
      %v814 = vadd.f32 %v681, %v813
      %v815 = vpop.f32.mrf.mxu0
      %v816 = vpop.f32.mrf.mxu0
      %v817 = vadd.f32 %v681, %v816
      %v818 = vpop.f32.mrf.mxu0
      %819 = vmatprep.mubr.bf16.mxu0 0
      %820 = vmatmul.mubr.bf16.gmra.mxu0 %v659
      %v821 = vpop.f32.mrf.mxu0
      %v822 = vadd.f32 %v681, %v821
      %v823 = vpop.f32.mrf.mxu0
      %v824 = vpop.f32.mrf.mxu0
      %v825 = vadd.f32 %v681, %v824
      %v826 = vpop.f32.mrf.mxu0
      %827 = vdwg.mxu0
      %828 = vmax.xlane.f32.xlu0 %v766
      %v829 = vpop.xlane.xlu0 %828
      %830 = vmax.xlane.f32.xlu0 %v769
      %v831 = vpop.xlane.xlu0 %830
      %832 = vmax.xlane.f32.xlu0 %v774
      %v833 = vpop.xlane.xlu0 %832
      %834 = vmax.xlane.f32.xlu0 %v777
      %v835 = vpop.xlane.xlu0 %834
      %836 = vmax.xlane.f32.xlu0 %v782
      %v837 = vpop.xlane.xlu0 %836
      %838 = vmax.xlane.f32.xlu0 %v785
      %v839 = vpop.xlane.xlu0 %838
      %840 = vmax.xlane.f32.xlu0 %v790
      %v841 = vpop.xlane.xlu0 %840
      %842 = vmax.xlane.f32.xlu0 %v793
      %v843 = vpop.xlane.xlu0 %842
      %844 = vmax.xlane.f32.xlu0 %v798
      %v845 = vpop.xlane.xlu0 %844
      %846 = vmax.xlane.f32.xlu0 %v801
      %v847 = vpop.xlane.xlu0 %846
      %848 = vmax.xlane.f32.xlu0 %v806
      %v849 = vpop.xlane.xlu0 %848
      %850 = vmax.xlane.f32.xlu0 %v809
      %v851 = vpop.xlane.xlu0 %850
      %852 = vmax.xlane.f32.xlu0 %v814
      %v853 = vpop.xlane.xlu0 %852
      %854 = vmax.xlane.f32.xlu0 %v817
      %v855 = vpop.xlane.xlu0 %854
      %856 = vmax.xlane.f32.xlu0 %v822
      %v857 = vpop.xlane.xlu0 %856
      %858 = vmax.xlane.f32.xlu0 %v825
      %v859 = vpop.xlane.xlu0 %858
      %v860 = vsub.f32 %v766, %v829
      %v861 = vsub.f32 %v769, %v831
      %v862 = vsub.f32 %v774, %v833
      %v863 = vsub.f32 %v777, %v835
      %v864 = vsub.f32 %v782, %v837
      %v865 = vsub.f32 %v785, %v839
      %v866 = vsub.f32 %v790, %v841
      %v867 = vsub.f32 %v793, %v843
      %v868 = vsub.f32 %v798, %v845
      %v869 = vsub.f32 %v801, %v847
      %v870 = vsub.f32 %v806, %v849
      %v871 = vsub.f32 %v809, %v851
      %v872 = vsub.f32 %v814, %v853
      %v873 = vsub.f32 %v817, %v855
      %v874 = vsub.f32 %v822, %v857
      %v875 = vsub.f32 %v825, %v859
      %v876 = vmul.f32 %v860, 1.442695
      %v877 = vpow.pop %v876
      %v878 = vmul.f32 %v861, 1.442695
      %v879 = vpow.pop %v878
      %v880 = vmul.f32 %v862, 1.442695
      %v881 = vpow.pop %v880
      %v882 = vmul.f32 %v863, 1.442695
      %v883 = vpow.pop %v882
      %v884 = vmul.f32 %v864, 1.442695
      %v885 = vpow.pop %v884
      %v886 = vmul.f32 %v865, 1.442695
      %v887 = vpow.pop %v886
      %v888 = vmul.f32 %v866, 1.442695
      %v889 = vpow.pop %v888
      %v890 = vmul.f32 %v867, 1.442695
      %v891 = vpow.pop %v890
      %v892 = vmul.f32 %v868, 1.442695
      %v893 = vpow.pop %v892
      %v894 = vmul.f32 %v869, 1.442695
      %v895 = vpow.pop %v894
      %v896 = vmul.f32 %v870, 1.442695
      %v897 = vpow.pop %v896
      %v898 = vmul.f32 %v871, 1.442695
      %v899 = vpow.pop %v898
      %v900 = vmul.f32 %v872, 1.442695
      %v901 = vpow.pop %v900
      %v902 = vmul.f32 %v873, 1.442695
      %v903 = vpow.pop %v902
      %v904 = vmul.f32 %v874, 1.442695
      %v905 = vpow.pop %v904
      %v906 = vmul.f32 %v875, 1.442695
      %v907 = vpow.pop %v906
      %908 = vadd.xlane.f32.xlu0 %v877
      %v909 = vpop.xlane.xlu0 %908
      %910 = vadd.xlane.f32.xlu0 %v879
      %v911 = vpop.xlane.xlu0 %910
      %912 = vadd.xlane.f32.xlu0 %v881
      %v913 = vpop.xlane.xlu0 %912
      %914 = vadd.xlane.f32.xlu0 %v883
      %v915 = vpop.xlane.xlu0 %914
      %916 = vadd.xlane.f32.xlu0 %v885
      %v917 = vpop.xlane.xlu0 %916
      %918 = vadd.xlane.f32.xlu0 %v887
      %v919 = vpop.xlane.xlu0 %918
      %920 = vadd.xlane.f32.xlu0 %v889
      %v921 = vpop.xlane.xlu0 %920
      %922 = vadd.xlane.f32.xlu0 %v891
      %v923 = vpop.xlane.xlu0 %922
      %924 = vadd.xlane.f32.xlu0 %v893
      %v925 = vpop.xlane.xlu0 %924
      %926 = vadd.xlane.f32.xlu0 %v895
      %v927 = vpop.xlane.xlu0 %926
      %928 = vadd.xlane.f32.xlu0 %v897
      %v929 = vpop.xlane.xlu0 %928
      %930 = vadd.xlane.f32.xlu0 %v899
      %v931 = vpop.xlane.xlu0 %930
      %932 = vadd.xlane.f32.xlu0 %v901
      %v933 = vpop.xlane.xlu0 %932
      %934 = vadd.xlane.f32.xlu0 %v903
      %v935 = vpop.xlane.xlu0 %934
      %936 = vadd.xlane.f32.xlu0 %v905
      %v937 = vpop.xlane.xlu0 %936
      %938 = vadd.xlane.f32.xlu0 %v907
      %v939 = vpop.xlane.xlu0 %938
      %v940 = vlog2.pop %v909
      %v941 = vmul.f32 %v940, 0.6931472
      %v942 = vlog2.pop %v911
      %v943 = vmul.f32 %v942, 0.6931472
      %v944 = vlog2.pop %v913
      %v945 = vmul.f32 %v944, 0.6931472
      %v946 = vlog2.pop %v915
      %v947 = vmul.f32 %v946, 0.6931472
      %v948 = vlog2.pop %v917
      %v949 = vmul.f32 %v948, 0.6931472
      %v950 = vlog2.pop %v919
      %v951 = vmul.f32 %v950, 0.6931472
      %v952 = vlog2.pop %v921
      %v953 = vmul.f32 %v952, 0.6931472
      %v954 = vlog2.pop %v923
      %v955 = vmul.f32 %v954, 0.6931472
      %v956 = vlog2.pop %v925
      %v957 = vmul.f32 %v956, 0.6931472
      %v958 = vlog2.pop %v927
      %v959 = vmul.f32 %v958, 0.6931472
      %v960 = vlog2.pop %v929
      %v961 = vmul.f32 %v960, 0.6931472
      %v962 = vlog2.pop %v931
      %v963 = vmul.f32 %v962, 0.6931472
      %v964 = vlog2.pop %v933
      %v965 = vmul.f32 %v964, 0.6931472
      %v966 = vlog2.pop %v935
      %v967 = vmul.f32 %v966, 0.6931472
      %v968 = vlog2.pop %v937
      %v969 = vmul.f32 %v968, 0.6931472
      %v970 = vlog2.pop %v939
      %v971 = vmul.f32 %v970, 0.6931472
      %v972 = vsub.f32 %v860, %v941
      %v973 = vsub.f32 %v861, %v943
      %v974 = vsub.f32 %v862, %v945
      %v975 = vsub.f32 %v863, %v947
      %v976 = vsub.f32 %v864, %v949
      %v977 = vsub.f32 %v865, %v951
      %v978 = vsub.f32 %v866, %v953
      %v979 = vsub.f32 %v867, %v955
      %v980 = vsub.f32 %v868, %v957
      %v981 = vsub.f32 %v869, %v959
      %v982 = vsub.f32 %v870, %v961
      %v983 = vsub.f32 %v871, %v963
      %v984 = vsub.f32 %v872, %v965
      %v985 = vsub.f32 %v873, %v967
      %v986 = vsub.f32 %v874, %v969
      %v987 = vsub.f32 %v875, %v971
      %988 = vst [vmem:[%s280] sm:$0xff] %v972
      %989 = vst [vmem:[%s280 + $0x8] sm:$0xff] %v973
      %990 = vst [vmem:[%s280 + $0x10] sm:$0xff] %v974
      %991 = vst [vmem:[%s280 + $0x18] sm:$0xff] %v975
      %992 = vst [vmem:[%s280 + $0x20] sm:$0xff] %v976
      %993 = vst [vmem:[%s280 + $0x28] sm:$0xff] %v977
      %994 = vst [vmem:[%s280 + $0x30] sm:$0xff] %v978
      %995 = vst [vmem:[%s280 + $0x38] sm:$0xff] %v979
      %996 = vst [vmem:[%s280 + $0x40] sm:$0xff] %v980
      %997 = vst [vmem:[%s280 + $0x48] sm:$0xff] %v981
      %998 = vst [vmem:[%s280 + $0x50] sm:$0xff] %v982
      %999 = vst [vmem:[%s280 + $0x58] sm:$0xff] %v983
      %1000 = vst [vmem:[%s280 + $0x60] sm:$0xff] %v984
      %1001 = vst [vmem:[%s280 + $0x68] sm:$0xff] %v985
      %1002 = vst [vmem:[%s280 + $0x70] sm:$0xff] %v986
      %1003 = vst [vmem:[%s280 + $0x78] sm:$0xff] %v987
      %s1004 = smul.u32 16, %s18
      %p1005 = scmp.lt.s32.totalorder %s1004, 31
      %s1006 = scalar_select %p1005, %s1004, 31
      %s1007 = smul.addr %s1006, 8
      %s1008 = scalar_lea.vmem %s7, %s1007
      // Predicated region
      $region49: #{forward.1} parent=47 // pred_check
        %p1009 = pneg %p188
      $region50: #{forward.1} parent=47 // pred_check_branch
        %1011 = sbr.rel (%p1009) target = $region52
      $region51: #{forward.1} parent=47 // pred_region
        %s1012 = smul.u32 16, %s18
      $region52: #{forward.1} parent=47 // pred_fallthru
        _
    $region48: #{forward.1} parent=5 // pred_fallthru
      _
    %p1013 = scmp.le.s32.totalorder 2, %s13
    // Predicated region
    $region53: #{forward.1} parent=5 // pred_check
      %p1014 = pneg %p1013
    $region54: #{forward.1} parent=5 // pred_check_branch
      %1016 = sbr.rel (%p1014) target = $region56
    $region55: #{forward.1} parent=5 // pred_region
      %s1017 = ssub.s32 %s13, 2
      // Predicated region
      $region57: #{forward.1} parent=55 // pred_check
        %p1018 = pneg %p194
      $region58: #{forward.1} parent=55 // pred_check_branch
        %1020 = sbr.rel (%p1018) target = $region60
      $region59: #{forward.1} parent=55 // pred_region
        %s1021 = smul.u32 16, %s19
        %p1022 = scmp.lt.s32.totalorder %s1021, 31
        %s1023 = scalar_select %p1022, %s1021, 31
        %s1024 = smul.addr %s1023, 8
        %s1025 = scalar_lea.vmem %s7, %s1024
      $region60: #{forward.1} parent=55 // pred_fallthru
        _
    $region56: #{forward.1} parent=5 // pred_fallthru
      _
  $region6: #{forward.1} parent=0 // loop_footer
    %s17 = sadd.s32 1, %s13
  $region7: #{forward.1} parent=0 // loop_footer_branch
    %12 = sbr.rel target = $region3
  $region8: #{forward.1} parent=0 // loop_exit
    _

</llo_original>
